<compile_context>
chip_gen: v7x
topology: tpu7x:2x2x1
jax: 0.10.0
libtpu: 0.0.40
codegen_flags: <defaults>
</compile_context>

<pallas_src>
import functools
from typing import NamedTuple

import numpy as np
import jax
import jax.numpy as jnp
from jax.experimental import pallas as pl
from jax.experimental.pallas import tpu as pltpu

LRELU_GAIN = 1.4142135623730951


def _round8(n: int) -> int:
    return -(-n // 8) * 8


def _slab_offsets(num_layers: int, c0: int, c: int):
    """Static row offsets into the packed constant slab (shared by pack & kernel)."""
    S = (num_layers + 1) * c          # total stacked style rows (uniform c_in per layer)
    Hh = num_layers * c               # total stacked hidden output channels
    off_w2 = _round8(S)
    off_w = off_w2 + _round8(Hh)
    off_x0 = off_w + _round8(Hh + 3)
    off_sel = off_x0 + _round8(c0)
    return S, Hh, off_w2, off_w, off_x0, off_sel


class GenConfig(NamedTuple):
    num_layers: int
    c0: int
    c: int
    w_dim: int
    batch: int
    base: int
    up: int
    res: int
    ncol: int


# ----------------------------- fused Pallas kernel -----------------------------

def _generator_kernel(num_layers, c0, c, w_dim, batch,
                      psi_ref, wlat_ref, vecs_ref, slab_ref, ups_ref, out_ref):
    """Fused generator: truncation -> all style affines -> modulated 1x1 convs
    (demod, biased lrelu) -> toRGB -> [0,255] scaling -> nearest upsample.

      psi_ref  : (1,)              SMEM  truncation psi
      wlat_ref : (D, B)            VMEM  stacked per-layer latents (D = num_ws*w_dim)
      vecs_ref : (vrows, 4)        VMEM  cols: [w_avg stacked | style bias | conv biases | 0]
      slab_ref : (nrows, ncol)     VMEM  packed constants (see _slab_offsets / pack_params)
      ups_ref  : (ncol, B*hw_out)  VMEM  0/1 block-diag nearest-upsample map
      out_ref  : (3, B*hw_out)     VMEM
    """
    S, Hh, off_w2, off_w, off_x0, off_sel = _slab_offsets(num_layers, c0, c)
    D = (num_layers + 1) * w_dim

    psi = psi_ref[0]

    vecs = vecs_ref[...]                                   # (vrows, 4)
    wavg = vecs[:D, 0:1]                                   # (D, 1)
    ab = vecs[:S, 1:2]                                     # (S, 1)
    ball = vecs[:, 2:3]                                    # (vrows, 1)

    slab = slab_ref[...]                                   # (nrows, ncol)
    a_blk = slab[0:S, :D]                                  # block-diag style affines
    w2_blk = slab[off_w2:off_w2 + Hh, :S]                  # block-diag W*W (precomputed)
    w_st = slab[off_w:off_w + _round8(Hh + 3), :c]         # stacked conv weights
    x = slab[off_x0:off_x0 + c0, :]                        # tiled learned const (c0, ncol)
    sel = slab[off_sel:off_sel + batch, :]                 # 0/1 sample -> column selector

    # 1) truncation trick, applied once to all num_ws latent slices
    w_t = wavg + (wlat_ref[...] - wavg) * psi                                   # (D, B)
    # 2) all style affines as ONE block-diagonal matmul
    s_all = jnp.dot(a_blk, w_t, preferred_element_type=jnp.float32) + ab        # (S, B)
    # 3) all hidden demod factors as ONE block-diagonal matmul
    d_all = jax.lax.rsqrt(
        jnp.dot(w2_blk, s_all * s_all, preferred_element_type=jnp.float32) + 1e-8)  # (Hh, B)
    # 4) one per-sample -> per-column broadcast matmul for every style & demod factor
    bc = jnp.dot(jnp.concatenate([s_all, d_all], axis=0), sel,
                 preferred_element_type=jnp.float32)                            # (S+Hh, ncol)

    # 5) hidden modulated 1x1 convs at base resolution (the nearest upsample
    #    commutes with 1x1 conv / demod / pointwise lrelu, so it is applied once
    #    at the end). Modulation is moved onto the input: W@(x*s) == (W*s)@x,
    #    demod applied as a per-column output scale.
    for li in range(num_layers):
        w_i = w_st[li * c:(li + 1) * c, :]                                      # (c, c)
        s_b = bc[li * c:(li + 1) * c, :]                                        # (c, ncol)
        d_b = bc[S + li * c:S + (li + 1) * c, :]                                # (c, ncol)
        b_i = ball[li * c:(li + 1) * c, :]                                      # (c, 1)
        y = jnp.dot(w_i, x * s_b, preferred_element_type=jnp.float32)
        y = y * d_b + b_i
        x = jnp.where(y >= 0.0, y, 0.2 * y) * LRELU_GAIN

    # 6) toRGB (modulated, no demod, no activation) fused with [0,255] scaling
    w_r = w_st[Hh:Hh + 3, :]                                                    # (3, c)
    s_r = bc[num_layers * c:(num_layers + 1) * c, :]
    b_r = ball[Hh:Hh + 3, :]
    rgb = jnp.dot(w_r, x * s_r, preferred_element_type=jnp.float32) + b_r       # (3, ncol)
    rgb = jnp.clip(rgb * 127.5 + 128.0, 0.0, 255.0)

    # 7) cumulative nearest upsample for the whole batch as one 0/1 matmul ->
    #    a single lane-dense (3, B*res*res) store. Padded columns are killed by
    #    the zero rows of the upsample map.
    out_ref[...] = jnp.dot(rgb, ups_ref[...], preferred_element_type=jnp.float32)


# ----------------------------- one-time host-side packing -----------------------------

def _block_diag(blocks):
    rows = sum(b.shape[0] for b in blocks)
    cols = sum(b.shape[1] for b in blocks)
    out = jnp.zeros((rows, cols), jnp.float32)
    r = q = 0
    for b in blocks:
        out = out.at[r:r + b.shape[0], q:q + b.shape[1]].set(b)
        r += b.shape[0]
        q += b.shape[1]
    return out


def pack_params(params, up_flags, batch):
    """Pack all generator constants into lane-aligned slabs (runs once, eagerly)."""
    layers = params["layers"]
    rgb = params["rgb"]
    num_layers = len(layers)
    c0, base, base2 = params["const"].shape
    assert base == base2
    w_dim = int(params["w_avg"].shape[0])
    c = int(layers[0]["W"].shape[0])
    # uniform-width synthetic config keeps packed-slab offsets static & aligned
    assert c0 == c == w_dim, (c0, c, w_dim)
    for layer in layers:
        assert layer["W"].shape == (c, c) and layer["A_T"].shape == (w_dim, c)
    assert rgb["W"].shape == (3, c) and rgb["A_T"].shape == (w_dim, c)
    assert len(up_flags) == num_layers

    hw = base * base
    up = 2 ** sum(1 for f in up_flags if f)
    res = base * up
    hw_out = res * res
    ncol = max(128, ((batch * hw + 127) // 128) * 128)   # lane-dense working width
    S, Hh, off_w2, off_w, off_x0, off_sel = _slab_offsets(num_layers, c0, c)
    D = (num_layers + 1) * w_dim
    assert D <= ncol and S <= ncol and c <= ncol

    def rows_to(a, rows):
        return jnp.pad(a, ((0, rows - a.shape[0]), (0, 0)))

    def lanes_to(a, cols):
        return jnp.pad(a, ((0, 0), (0, cols - a.shape[1])))

    # block-diagonal style affines (A_i^T on the diagonal, incl. toRGB)
    a_blk = _block_diag([l["A_T"].T for l in layers] + [rgb["A_T"].T])           # (S, D)
    # block-diagonal W*W for the demod factors (precomputed squares, hidden only)
    w2_blk = _block_diag([l["W"] * l["W"] for l in layers])                      # (Hh, Hh)
    # stacked conv weights (hidden + toRGB)
    w_st = jnp.concatenate([l["W"] for l in layers] + [rgb["W"]], axis=0)        # (Hh+3, c)
    # learned const, batch-tiled onto the lane axis and zero-padded to ncol
    x0 = jnp.tile(params["const"].reshape(c0, hw), (1, batch))                   # (c0, B*hw)
    # 0/1 per-sample -> per-column broadcast selector (baked numpy constant)
    sel = np.zeros((batch, ncol), np.float32)
    for b in range(batch):
        sel[b, b * hw:(b + 1) * hw] = 1.0

    slab = jnp.concatenate([
        rows_to(lanes_to(a_blk, ncol), _round8(S)),
        rows_to(lanes_to(w2_blk, ncol), _round8(Hh)),
        rows_to(lanes_to(w_st, ncol), _round8(Hh + 3)),
        rows_to(lanes_to(x0, ncol), _round8(c0)),
        jnp.asarray(sel),
    ], axis=0).astype(jnp.float32)                                               # (nrows, ncol)
    assert slab.shape == (off_sel + batch, ncol)

    # small column-vector slab: [w_avg stacked | style bias stacked | conv biases | 0]
    vrows = max(D, S, _round8(Hh + 3))

    def col(v):
        return jnp.pad(v, (0, vrows - v.shape[0]))[:, None]

    vecs = jnp.concatenate([
        col(jnp.tile(params["w_avg"], (num_layers + 1,))),
        col(jnp.concatenate([l["A_b"] for l in layers] + [rgb["A_b"]])),
        col(jnp.concatenate([l["b"] for l in layers] + [rgb["b"]])),
        jnp.zeros((vrows, 1), jnp.float32),
    ], axis=1).astype(jnp.float32)                                               # (vrows, 4)

    # 0/1 cumulative nearest-upsample map, block-diagonal over the batch:
    # rgb column (b*hw + src_pixel) -> output column (b*hw_out + out_pixel)
    idx = np.arange(res)
    src = ((idx[:, None] // up) * base + (idx[None, :] // up)).reshape(-1)       # (hw_out,)
    ups = np.zeros((ncol, batch * hw_out), np.float32)
    for b in range(batch):
        ups[b * hw + src, b * hw_out + np.arange(hw_out)] = 1.0
    ups = jnp.asarray(ups)

    cfg = GenConfig(num_layers=num_layers, c0=c0, c=c, w_dim=w_dim, batch=batch,
                    base=base, up=up, res=res, ncol=ncol)
    return {"slab": slab, "vecs": vecs, "ups": ups}, cfg


# ----------------------------- wrapper (JAX glue) -----------------------------

@functools.partial(jax.jit, static_argnames=("cfg",))
def generate_images(slab, vecs, ups, w, truncation_psi, *, cfg):
    """JAX/Pallas equivalent of PretrainedGenerator.forward (synthetic G)."""
    batch, num_ws, w_dim = w.shape
    assert (batch, num_ws, w_dim) == (cfg.batch, cfg.num_layers + 1, cfg.w_dim)

    psi = jnp.asarray(truncation_psi, jnp.float32).reshape(1)
    # only per-call device-side layout op: (B, num_ws, w_dim) -> (num_ws*w_dim, B)
    wlat = jnp.transpose(w.astype(jnp.float32), (1, 2, 0)).reshape(num_ws * w_dim, batch)

    vmem = pl.BlockSpec(memory_space=pltpu.MemorySpace.VMEM)
    smem = pl.BlockSpec(memory_space=pltpu.MemorySpace.SMEM)

    # TODO(synk): on v7x (2 TensorCores) split batch / output tiles over a
    #             ("parallel",) grid axis; a grid-less call pins work to one TC.
    out = pl.pallas_call(
        functools.partial(_generator_kernel, cfg.num_layers, cfg.c0, cfg.c,
                          cfg.w_dim, cfg.batch),
        out_shape=jax.ShapeDtypeStruct((3, cfg.batch * cfg.res * cfg.res), jnp.float32),
        in_specs=[smem, vmem, vmem, vmem, vmem],
        out_specs=vmem,
    )(psi, wlat, vecs, slab, ups)

    # TODO(synk): gen_utils.w_to_img / save_img uint8 cast + NHWC permute + PNG
    #             writing are left to the caller; we return NCHW float32 in [0,255].
    return out.reshape(3, batch, cfg.res, cfg.res).transpose(1, 0, 2, 3)


# ----------------------------- params & pure-JAX reference -----------------------------

def init_params(key, *, w_dim, c0, channels, num_ws):
    del num_ws  # interface parity; layout is checked in pack_params
    n_keys = 2 * len(channels) + 4
    keys = jax.random.split(key, n_keys)
    ki = iter(range(n_keys))
    params = {
        "w_avg": 0.1 * jax.random.normal(keys[next(ki)], (w_dim,), jnp.float32),
        "const": jax.random.normal(keys[next(ki)], (c0, 4, 4), jnp.float32),
    }
    layers = []
    c_in = c0
    for c_out in channels:
        layers.append({
            "A_T": jax.random.normal(keys[next(ki)], (w_dim, c_in), jnp.float32)
                   / jnp.sqrt(jnp.float32(w_dim)),
            "A_b": jnp.ones((c_in,), jnp.float32),          # style bias init = 1
            "W": jax.random.normal(keys[next(ki)], (c_out, c_in), jnp.float32)
                 / jnp.sqrt(jnp.float32(c_in)),
            "b": jnp.zeros((c_out,), jnp.float32),
        })
        c_in = c_out
    params["layers"] = layers
    params["rgb"] = {
        "A_T": jax.random.normal(keys[next(ki)], (w_dim, c_in), jnp.float32)
               / jnp.sqrt(jnp.float32(w_dim)),
        "A_b": jnp.ones((c_in,), jnp.float32),
        "W": jax.random.normal(keys[next(ki)], (3, c_in), jnp.float32)
             / jnp.sqrt(jnp.float32(c_in)),
        "b": jnp.zeros((3,), jnp.float32),
    }
    return params


def _reference_generate(params, w, psi, up_flags):
    """Pure-JAX reference with the original weight-modulated, upsample-between-layers
    formulation (self-check only)."""
    hp = jax.lax.Precision.HIGHEST
    wavg = params["w_avg"][None, None, :]
    wt = wavg + (w - wavg) * psi
    B = w.shape[0]
    x = jnp.broadcast_to(params["const"][None], (B,) + params["const"].shape)
    for i, layer in enumerate(params["layers"]):
        s = jnp.dot(wt[:, i], layer["A_T"], precision=hp) + layer["A_b"]   # (B, c_in)
        wm = layer["W"][None] * s[:, None, :]                              # (B, c_out, c_in)
        d = jax.lax.rsqrt(jnp.sum(wm * wm, axis=2, keepdims=True) + 1e-8)
        wm = wm * d
        Bc, c_in, h, wd = x.shape
        y = jnp.einsum("boc,bcp->bop", wm, x.reshape(Bc, c_in, h * wd), precision=hp)
        y = y + layer["b"][None, :, None]
        y = jnp.where(y >= 0.0, y, 0.2 * y) * LRELU_GAIN
        x = y.reshape(Bc, -1, h, wd)
        if up_flags[i]:
            x = jnp.repeat(jnp.repeat(x, 2, axis=2), 2, axis=3)
    rgb = params["rgb"]
    s = jnp.dot(wt[:, -1], rgb["A_T"], precision=hp) + rgb["A_b"]
    wm = rgb["W"][None] * s[:, None, :]
    Bc, c_in, h, wd = x.shape
    y = jnp.einsum("boc,bcp->bop", wm, x.reshape(Bc, c_in, h * wd), precision=hp)
    y = y + rgb["b"][None, :, None]
    y = jnp.clip(y * 127.5 + 128.0, 0.0, 255.0)
    return y.reshape(Bc, 3, h, wd)


# ----------------------------- main -----------------------------

if __name__ == "__main__":
    # Small synthetic config consistent with the forward pass:
    # w: (batch, num_ws, w_dim); output image: (batch, 3, 16, 16) NCHW in [0,255].
    B, NUM_WS, W_DIM = 2, 4, 32
    C0, CHANNELS = 32, (32, 32, 32)
    UP_FLAGS = (True, True, False)          # 4 -> 8 -> 16 -> 16
    TRUNCATION_PSI = 0.7

    key = jax.random.PRNGKey(0)
    k_params, k_w = jax.random.split(key)
    params = init_params(k_params, w_dim=W_DIM, c0=C0, channels=CHANNELS,
                         num_ws=NUM_WS)
    packed, cfg = pack_params(params, UP_FLAGS, B)          # one-time packing
    w = jax.random.normal(k_w, (B, NUM_WS, W_DIM), jnp.float32)

    images = generate_images(packed["slab"], packed["vecs"], packed["ups"],
                             w, TRUNCATION_PSI, cfg=cfg)
    images = jax.block_until_ready(images)

    assert images.shape == (B, 3, 16, 16), images.shape
    assert images.dtype == jnp.float32

    # correctness self-check against the unfused formulation (loose tolerance on
    # the [0,255] scale: default MXU precision differs from the HIGHEST-precision
    # XLA reference, but structural errors would be off by tens/hundreds).
    ref = _reference_generate(params, w, TRUNCATION_PSI, UP_FLAGS)
    max_err = float(jnp.max(jnp.abs(images - ref)))
    assert max_err < 5.0, f"max abs error vs reference: {max_err}"

    print("KERNEL_OK")
</pallas_src>

<mosaic_0001>
module attributes {stable_mosaic.version = 11 : i64} {
  func.func @_generator_kernel(%arg0: memref<1xf32, #tpu.memory_space<smem>>, %arg1: memref<128x2xf32, #tpu.memory_space<vmem>>, %arg2: memref<128x4xf32, #tpu.memory_space<vmem>>, %arg3: memref<362x128xf32, #tpu.memory_space<vmem>>, %arg4: memref<128x512xf32, #tpu.memory_space<vmem>>, %arg5: memref<3x512xf32, #tpu.memory_space<vmem>>) attributes {dimension_semantics = [], scalar_prefetch = 0 : i64, scratch_operands = 0 : i64, tpu.core_type = #tpu.core_type<tc>} {
    %c0 = arith.constant 0 : index
    %0 = memref.load %arg0[%c0] : memref<1xf32, #tpu.memory_space<smem>>
    %c0_0 = arith.constant 0 : index
    %c0_1 = arith.constant 0 : index
    %1 = vector.load %arg2[%c0_0, %c0_1] : memref<128x4xf32, #tpu.memory_space<vmem>>, vector<128x4xf32>
    %2 = vector.extract_strided_slice %1 {offsets = [0, 0], sizes = [128, 1], strides = [1, 1]} : vector<128x4xf32> to vector<128x1xf32>
    %3 = vector.extract_strided_slice %1 {offsets = [0, 1], sizes = [128, 1], strides = [1, 1]} : vector<128x4xf32> to vector<128x1xf32>
    %4 = vector.extract_strided_slice %1 {offsets = [0, 2], sizes = [128, 1], strides = [1, 1]} : vector<128x4xf32> to vector<128x1xf32>
    %c0_2 = arith.constant 0 : index
    %c0_3 = arith.constant 0 : index
    %5 = vector.load %arg3[%c0_2, %c0_3] : memref<362x128xf32, #tpu.memory_space<vmem>>, vector<362x128xf32>
    %6 = vector.extract_strided_slice %5 {offsets = [0, 0], sizes = [128, 128], strides = [1, 1]} : vector<362x128xf32> to vector<128x128xf32>
    %7 = vector.extract_strided_slice %5 {offsets = [128, 0], sizes = [96, 128], strides = [1, 1]} : vector<362x128xf32> to vector<96x128xf32>
    %8 = vector.extract_strided_slice %5 {offsets = [224, 0], sizes = [104, 32], strides = [1, 1]} : vector<362x128xf32> to vector<104x32xf32>
    %9 = vector.extract_strided_slice %5 {offsets = [328, 0], sizes = [32, 128], strides = [1, 1]} : vector<362x128xf32> to vector<32x128xf32>
    %10 = vector.extract_strided_slice %5 {offsets = [360, 0], sizes = [2, 128], strides = [1, 1]} : vector<362x128xf32> to vector<2x128xf32>
    %c0_4 = arith.constant 0 : index
    %c0_5 = arith.constant 0 : index
    %11 = vector.load %arg1[%c0_4, %c0_5] : memref<128x2xf32, #tpu.memory_space<vmem>>, vector<128x2xf32>
    %12 = vector.broadcast %2 : vector<128x1xf32> to vector<128x2xf32>
    %13 = arith.subf %11, %12 : vector<128x2xf32>
    %14 = vector.broadcast %0 : f32 to vector<128x2xf32>
    %15 = arith.mulf %13, %14 : vector<128x2xf32>
    %16 = vector.broadcast %2 : vector<128x1xf32> to vector<128x2xf32>
    %17 = arith.addf %16, %15 : vector<128x2xf32>
    %cst = arith.constant dense<0.000000e+00> : vector<128x2xf32>
    %18 = tpu.matmul %6, %17, %cst {dimension_numbers = #tpu.dot_dimension_numbers<[1], [0], [0], [1], [0, 0, 1, 1], [], []>} : vector<128x128xf32>, vector<128x2xf32>, vector<128x2xf32> -> vector<128x2xf32>
    %19 = vector.broadcast %3 : vector<128x1xf32> to vector<128x2xf32>
    %20 = arith.addf %18, %19 : vector<128x2xf32>
    %21 = arith.mulf %20, %20 : vector<128x2xf32>
    %cst_6 = arith.constant dense<0.000000e+00> : vector<96x2xf32>
    %22 = tpu.matmul %7, %21, %cst_6 {dimension_numbers = #tpu.dot_dimension_numbers<[1], [0], [0], [1], [0, 0, 1, 1], [], []>} : vector<96x128xf32>, vector<128x2xf32>, vector<96x2xf32> -> vector<96x2xf32>
    %cst_7 = arith.constant 9.99999993E-9 : f32
    %23 = vector.broadcast %cst_7 : f32 to vector<96x2xf32>
    %24 = arith.addf %22, %23 : vector<96x2xf32>
    %25 = math.rsqrt %24 : vector<96x2xf32>
    %26 = tpu.concatenate %20, %25 in 0 : vector<128x2xf32>, vector<96x2xf32> -> vector<224x2xf32>
    %cst_8 = arith.constant dense<0.000000e+00> : vector<224x128xf32>
    %27 = tpu.matmul %26, %10, %cst_8 {dimension_numbers = #tpu.dot_dimension_numbers<[1], [0], [0], [1], [0, 0, 1, 1], [], []>} : vector<224x2xf32>, vector<2x128xf32>, vector<224x128xf32> -> vector<224x128xf32>
    %28 = vector.extract_strided_slice %8 {offsets = [0, 0], sizes = [32, 32], strides = [1, 1]} : vector<104x32xf32> to vector<32x32xf32>
    %29 = vector.extract_strided_slice %27 {offsets = [0, 0], sizes = [32, 128], strides = [1, 1]} : vector<224x128xf32> to vector<32x128xf32>
    %30 = vector.extract_strided_slice %27 {offsets = [128, 0], sizes = [32, 128], strides = [1, 1]} : vector<224x128xf32> to vector<32x128xf32>
    %31 = vector.extract_strided_slice %4 {offsets = [0, 0], sizes = [32, 1], strides = [1, 1]} : vector<128x1xf32> to vector<32x1xf32>
    %32 = arith.mulf %9, %29 : vector<32x128xf32>
    %cst_9 = arith.constant dense<0.000000e+00> : vector<32x128xf32>
    %33 = tpu.matmul %28, %32, %cst_9 {dimension_numbers = #tpu.dot_dimension_numbers<[1], [0], [0], [1], [0, 0, 1, 1], [], []>} : vector<32x32xf32>, vector<32x128xf32>, vector<32x128xf32> -> vector<32x128xf32>
    %34 = arith.mulf %33, %30 : vector<32x128xf32>
    %35 = vector.broadcast %31 : vector<32x1xf32> to vector<32x128xf32>
    %36 = arith.addf %34, %35 : vector<32x128xf32>
    %cst_10 = arith.constant 0.000000e+00 : f32
    %37 = vector.broadcast %cst_10 : f32 to vector<32x128xf32>
    %38 = arith.cmpf oge, %36, %37 : vector<32x128xf32>
    %cst_11 = arith.constant 2.000000e-01 : f32
    %39 = vector.broadcast %cst_11 : f32 to vector<32x128xf32>
    %40 = arith.mulf %39, %36 : vector<32x128xf32>
    %41 = arith.select %38, %36, %40 : vector<32x128xi1>, vector<32x128xf32>
    %cst_12 = arith.constant 1.41421354 : f32
    %42 = vector.broadcast %cst_12 : f32 to vector<32x128xf32>
    %43 = arith.mulf %41, %42 : vector<32x128xf32>
    %44 = vector.extract_strided_slice %8 {offsets = [32, 0], sizes = [32, 32], strides = [1, 1]} : vector<104x32xf32> to vector<32x32xf32>
    %45 = vector.extract_strided_slice %27 {offsets = [32, 0], sizes = [32, 128], strides = [1, 1]} : vector<224x128xf32> to vector<32x128xf32>
    %46 = vector.extract_strided_slice %27 {offsets = [160, 0], sizes = [32, 128], strides = [1, 1]} : vector<224x128xf32> to vector<32x128xf32>
    %47 = vector.extract_strided_slice %4 {offsets = [32, 0], sizes = [32, 1], strides = [1, 1]} : vector<128x1xf32> to vector<32x1xf32>
    %48 = arith.mulf %43, %45 : vector<32x128xf32>
    %cst_13 = arith.constant dense<0.000000e+00> : vector<32x128xf32>
    %49 = tpu.matmul %44, %48, %cst_13 {dimension_numbers = #tpu.dot_dimension_numbers<[1], [0], [0], [1], [0, 0, 1, 1], [], []>} : vector<32x32xf32>, vector<32x128xf32>, vector<32x128xf32> -> vector<32x128xf32>
    %50 = arith.mulf %49, %46 : vector<32x128xf32>
    %51 = vector.broadcast %47 : vector<32x1xf32> to vector<32x128xf32>
    %52 = arith.addf %50, %51 : vector<32x128xf32>
    %cst_14 = arith.constant 0.000000e+00 : f32
    %53 = vector.broadcast %cst_14 : f32 to vector<32x128xf32>
    %54 = arith.cmpf oge, %52, %53 : vector<32x128xf32>
    %cst_15 = arith.constant 2.000000e-01 : f32
    %55 = vector.broadcast %cst_15 : f32 to vector<32x128xf32>
    %56 = arith.mulf %55, %52 : vector<32x128xf32>
    %57 = arith.select %54, %52, %56 : vector<32x128xi1>, vector<32x128xf32>
    %cst_16 = arith.constant 1.41421354 : f32
    %58 = vector.broadcast %cst_16 : f32 to vector<32x128xf32>
    %59 = arith.mulf %57, %58 : vector<32x128xf32>
    %60 = vector.extract_strided_slice %8 {offsets = [64, 0], sizes = [32, 32], strides = [1, 1]} : vector<104x32xf32> to vector<32x32xf32>
    %61 = vector.extract_strided_slice %27 {offsets = [64, 0], sizes = [32, 128], strides = [1, 1]} : vector<224x128xf32> to vector<32x128xf32>
    %62 = vector.extract_strided_slice %27 {offsets = [192, 0], sizes = [32, 128], strides = [1, 1]} : vector<224x128xf32> to vector<32x128xf32>
    %63 = vector.extract_strided_slice %4 {offsets = [64, 0], sizes = [32, 1], strides = [1, 1]} : vector<128x1xf32> to vector<32x1xf32>
    %64 = arith.mulf %59, %61 : vector<32x128xf32>
    %cst_17 = arith.constant dense<0.000000e+00> : vector<32x128xf32>
    %65 = tpu.matmul %60, %64, %cst_17 {dimension_numbers = #tpu.dot_dimension_numbers<[1], [0], [0], [1], [0, 0, 1, 1], [], []>} : vector<32x32xf32>, vector<32x128xf32>, vector<32x128xf32> -> vector<32x128xf32>
    %66 = arith.mulf %65, %62 : vector<32x128xf32>
    %67 = vector.broadcast %63 : vector<32x1xf32> to vector<32x128xf32>
    %68 = arith.addf %66, %67 : vector<32x128xf32>
    %cst_18 = arith.constant 0.000000e+00 : f32
    %69 = vector.broadcast %cst_18 : f32 to vector<32x128xf32>
    %70 = arith.cmpf oge, %68, %69 : vector<32x128xf32>
    %cst_19 = arith.constant 2.000000e-01 : f32
    %71 = vector.broadcast %cst_19 : f32 to vector<32x128xf32>
    %72 = arith.mulf %71, %68 : vector<32x128xf32>
    %73 = arith.select %70, %68, %72 : vector<32x128xi1>, vector<32x128xf32>
    %cst_20 = arith.constant 1.41421354 : f32
    %74 = vector.broadcast %cst_20 : f32 to vector<32x128xf32>
    %75 = arith.mulf %73, %74 : vector<32x128xf32>
    %76 = vector.extract_strided_slice %8 {offsets = [96, 0], sizes = [3, 32], strides = [1, 1]} : vector<104x32xf32> to vector<3x32xf32>
    %77 = vector.extract_strided_slice %27 {offsets = [96, 0], sizes = [32, 128], strides = [1, 1]} : vector<224x128xf32> to vector<32x128xf32>
    %78 = vector.extract_strided_slice %4 {offsets = [96, 0], sizes = [3, 1], strides = [1, 1]} : vector<128x1xf32> to vector<3x1xf32>
    %79 = arith.mulf %75, %77 : vector<32x128xf32>
    %cst_21 = arith.constant dense<0.000000e+00> : vector<3x128xf32>
    %80 = tpu.matmul %76, %79, %cst_21 {dimension_numbers = #tpu.dot_dimension_numbers<[1], [0], [0], [1], [0, 0, 1, 1], [], []>} : vector<3x32xf32>, vector<32x128xf32>, vector<3x128xf32> -> vector<3x128xf32>
    %81 = vector.broadcast %78 : vector<3x1xf32> to vector<3x128xf32>
    %82 = arith.addf %80, %81 : vector<3x128xf32>
    %cst_22 = arith.constant 1.275000e+02 : f32
    %83 = vector.broadcast %cst_22 : f32 to vector<3x128xf32>
    %84 = arith.mulf %82, %83 : vector<3x128xf32>
    %cst_23 = arith.constant 1.280000e+02 : f32
    %85 = vector.broadcast %cst_23 : f32 to vector<3x128xf32>
    %86 = arith.addf %84, %85 : vector<3x128xf32>
    %cst_24 = arith.constant 0.000000e+00 : f32
    %cst_25 = arith.constant 2.550000e+02 : f32
    %87 = vector.broadcast %cst_24 : f32 to vector<3x128xf32>
    %88 = arith.maximumf %87, %86 : vector<3x128xf32>
    %89 = vector.broadcast %cst_25 : f32 to vector<3x128xf32>
    %90 = arith.minimumf %89, %88 : vector<3x128xf32>
    %c0_26 = arith.constant 0 : index
    %c0_27 = arith.constant 0 : index
    %91 = vector.load %arg4[%c0_26, %c0_27] : memref<128x512xf32, #tpu.memory_space<vmem>>, vector<128x512xf32>
    %cst_28 = arith.constant dense<0.000000e+00> : vector<3x512xf32>
    %92 = tpu.matmul %90, %91, %cst_28 {dimension_numbers = #tpu.dot_dimension_numbers<[1], [0], [0], [1], [0, 0, 1, 1], [], []>} : vector<3x128xf32>, vector<128x512xf32>, vector<3x512xf32> -> vector<3x512xf32>
    %c0_29 = arith.constant 0 : index
    %c0_30 = arith.constant 0 : index
    %93 = vector.load %arg5[%c0_29, %c0_30] : memref<3x512xf32, #tpu.memory_space<vmem>>, vector<3x512xf32>
    tpu.vector_store %arg5[%c0_29, %c0_30], %92 {strides = array<i32>} : memref<3x512xf32, #tpu.memory_space<vmem>>, vector<3x512xf32>,
    return
  }
}

</mosaic_0001>

<llo_original>
// kernel: generate_images.1
$region0: #{generate_images.1}
  #allocation0 [shape = 'u32[]', space=smem, size = 0x4, offset = 0x4, fixed_abs, tag = 'smem constant byte address 0x4 - core index']
  #allocation1 [shape = 'u32[144,128]{1,0:T(1,128)}', space=vmem, size = 0x12000, scoped, tag = 'internal scratch']
  #allocation2 [shape = 'f32[1]{0:T(128)S(6)}', space=smem, size = 0x200, scoped, tag = 'scoped memory for generate_images.1']
  %s0 = inlined_call_operand.<no memory space> [shape: f32[1], index: 0, kind: input, shape index: {}]
  %s1 = inlined_call_operand.vmem [shape: f32[128,2], index: 1, kind: input, shape index: {}]
  %s2 = inlined_call_operand.vmem [shape: f32[128,4], index: 2, kind: input, shape index: {}]
  %s3 = inlined_call_operand.hbm [shape: f32[362,128], index: 3, kind: input, shape index: {}]
  %s4 = inlined_call_operand.hbm [shape: f32[128,512], index: 4, kind: input, shape index: {}]
  %s5 = inlined_call_operand.vmem [shape: f32[3,512], index: 5, kind: output, shape index: {}]
  %s6 = sld [smem:[#allocation0]]
  $region38: #{generate_images.1} parent=0
    _
  %s8 = ssub.s32 1, %s6
  %s9 = scalar_select 0, %s8, %s6
  %10 = sst [smem:[#allocation2]] %s0
  $region1: #{generate_images.1} parent=0
    #allocation3 [shape = 'u8[188416]{0}', space=vmem, size = 0x2e000, scoped, tag = 'input window, operand 3, single buffered']
    #allocation4 [shape = 's32[1]{0}', space=sflag, size = 0x4, scoped, tag = 'scoped memory for generate_images.1']
    #allocation5 [shape = 'u8[262144]{0}', space=vmem, size = 0x40000, scoped, tag = 'input window, operand 4, single buffered']
    #allocation6 [shape = 's32[1]{0}', space=sflag, size = 0x4, scoped, tag = 'scoped memory for generate_images.1']
    %11 = vsyncpa [#allocation4], 0
    %12 = vsyncpa [#allocation6], 0
    // Predicated region
    $region2: #{generate_images.1} parent=1 // pred_check
      _
    $region3: #{generate_images.1} parent=1 // pred_check_branch
      %14 = sbr.rel (0) target = $region5
    $region4: #{generate_images.1} parent=1 // pred_region
      _
    $region5: #{generate_images.1} parent=1 // pred_fallthru
      _
    // Predicated region
    $region6: #{generate_images.1} parent=1 // pred_check
      _
    $region7: #{generate_images.1} parent=1 // pred_check_branch
      %16 = sbr.rel (0) target = $region9
    $region8: #{generate_images.1} parent=1 // pred_region
      _
    $region9: #{generate_images.1} parent=1 // pred_fallthru
      _
    // Predicated region
    $region10: #{generate_images.1} parent=1 // pred_check
      _
    $region11: #{generate_images.1} parent=1 // pred_check_branch
      %18 = sbr.rel (0) target = $region13
    $region12: #{generate_images.1} parent=1 // pred_region
      _
    $region13: #{generate_images.1} parent=1 // pred_fallthru
      _
    // Predicated region
    $region14: #{generate_images.1} parent=1 // pred_check
      _
    $region15: #{generate_images.1} parent=1 // pred_check_branch
      %20 = sbr.rel (0) target = $region17
    $region16: #{generate_images.1} parent=1 // pred_region
      %s22 = ssub.s32 5888, 5888
      %23 = vsyncadd [#allocation4], %s22
      %s24 = sshll.u32 [#allocation3], 4
      %s25 = int_to_ptr.vmem [resolvable:$true] %s24
      %30 = dma.hbm_to_vmem [thread:$0]  %s3, 5888, %s25, [#allocation4], 128, 128, 8
    $region17: #{generate_images.1} parent=1 // pred_fallthru
      _
    // Predicated region
    $region18: #{generate_images.1} parent=1 // pred_check
      _
    $region19: #{generate_images.1} parent=1 // pred_check_branch
      %32 = sbr.rel (0) target = $region21
    $region20: #{generate_images.1} parent=1 // pred_region
      %s34 = ssub.s32 8192, 8192
      %35 = vsyncadd [#allocation6], %s34
      %s36 = sshll.u32 [#allocation5], 4
      %s37 = int_to_ptr.vmem [resolvable:$true] %s36
      %42 = dma.hbm_to_vmem [thread:$0]  %s4, 8192, %s37, [#allocation6], 512, 512, 32
    $region21: #{generate_images.1} parent=1 // pred_fallthru
      _
    // Predicated region
    $region22: #{generate_images.1} parent=1 // pred_check
      _
    $region23: #{generate_images.1} parent=1 // pred_check_branch
      %44 = sbr.rel (0) target = $region25
    $region24: #{generate_images.1} parent=1 // pred_region
      %45 = dma.done [#allocation4], 5888
    $region25: #{generate_images.1} parent=1 // pred_fallthru
      _
    // Predicated region
    $region26: #{generate_images.1} parent=1 // pred_check
      _
    $region27: #{generate_images.1} parent=1 // pred_check_branch
      %47 = sbr.rel (0) target = $region29
    $region28: #{generate_images.1} parent=1 // pred_region
      %48 = dma.done [#allocation6], 8192
    $region29: #{generate_images.1} parent=1 // pred_fallthru
      _
    %s49 = sld [smem:[#allocation2]]
    %v50 = vld [vmem:[%s2] sm:$0xff]
    %v51 = vld [vmem:[%s2 + $0x8] sm:$0xff]
    %v52 = vld [vmem:[%s2 + $0x10] sm:$0xff]
    %v53 = vld [vmem:[%s2 + $0x18] sm:$0xff]
    %v54 = vld [vmem:[%s2 + $0x20] sm:$0xff]
    %v55 = vld [vmem:[%s2 + $0x28] sm:$0xff]
    %v56 = vld [vmem:[%s2 + $0x30] sm:$0xff]
    %v57 = vld [vmem:[%s2 + $0x38] sm:$0xff]
    %v58 = vld [vmem:[%s2 + $0x40] sm:$0xff]
    %v59 = vld [vmem:[%s2 + $0x48] sm:$0xff]
    %v60 = vld [vmem:[%s2 + $0x50] sm:$0xff]
    %v61 = vld [vmem:[%s2 + $0x58] sm:$0xff]
    %v62 = vld [vmem:[%s2 + $0x60] sm:$0xff]
    %v63 = vld [vmem:[%s2 + $0x68] sm:$0xff]
    %v64 = vld [vmem:[%s2 + $0x70] sm:$0xff]
    %v65 = vld [vmem:[%s2 + $0x78] sm:$0xff]
    %v66 = vld [vmem:[#allocation3] sm:$0xff]
    %v67 = vld [vmem:[#allocation3 + $0x8] sm:$0xff]
    %v68 = vld [vmem:[#allocation3 + $0x10] sm:$0xff]
    %v69 = vld [vmem:[#allocation3 + $0x18] sm:$0xff]
    %v70 = vld [vmem:[#allocation3 + $0x20] sm:$0xff]
    %v71 = vld [vmem:[#allocation3 + $0x28] sm:$0xff]
    %v72 = vld [vmem:[#allocation3 + $0x30] sm:$0xff]
    %v73 = vld [vmem:[#allocation3 + $0x38] sm:$0xff]
    %v74 = vld [vmem:[#allocation3 + $0x40] sm:$0xff]
    %v75 = vld [vmem:[#allocation3 + $0x48] sm:$0xff]
    %v76 = vld [vmem:[#allocation3 + $0x50] sm:$0xff]
    %v77 = vld [vmem:[#allocation3 + $0x58] sm:$0xff]
    %v78 = vld [vmem:[#allocation3 + $0x60] sm:$0xff]
    %v79 = vld [vmem:[#allocation3 + $0x68] sm:$0xff]
    %v80 = vld [vmem:[#allocation3 + $0x70] sm:$0xff]
    %v81 = vld [vmem:[#allocation3 + $0x78] sm:$0xff]
    %v82 = vld [vmem:[#allocation3 + $0x80] sm:$0xff]
    %v83 = vld [vmem:[#allocation3 + $0x88] sm:$0xff]
    %v84 = vld [vmem:[#allocation3 + $0x90] sm:$0xff]
    %v85 = vld [vmem:[#allocation3 + $0x98] sm:$0xff]
    %v86 = vld [vmem:[#allocation3 + $0xa0] sm:$0xff]
    %v87 = vld [vmem:[#allocation3 + $0xa8] sm:$0xff]
    %v88 = vld [vmem:[#allocation3 + $0xb0] sm:$0xff]
    %v89 = vld [vmem:[#allocation3 + $0xb8] sm:$0xff]
    %v90 = vld [vmem:[#allocation3 + $0xc0] sm:$0xff]
    %v91 = vld [vmem:[#allocation3 + $0xc8] sm:$0xff]
    %v92 = vld [vmem:[#allocation3 + $0xd0] sm:$0xff]
    %v93 = vld [vmem:[#allocation3 + $0xd8] sm:$0xff]
    %v94 = vld [vmem:[#allocation3 + $0xe0] sm:$0xff]
    %v95 = vld [vmem:[#allocation3 + $0xe8] sm:$0xff]
    %v96 = vld [vmem:[#allocation3 + $0xf0] sm:$0xff]
    %v97 = vld [vmem:[#allocation3 + $0xf8] sm:$0xff]
    %v98 = vld [vmem:[#allocation3 + $0x100] sm:$0xff]
    %v99 = vld [vmem:[#allocation3 + $0x108] sm:$0xff]
    %v100 = vld [vmem:[#allocation3 + $0x110] sm:$0xff]
    %v101 = vld [vmem:[#allocation3 + $0x118] sm:$0xff]
    %v102 = vld [vmem:[#allocation3 + $0x120] sm:$0xff]
    %v103 = vld [vmem:[#allocation3 + $0x128] sm:$0xff]
    %v104 = vld [vmem:[#allocation3 + $0x130] sm:$0xff]
    %v105 = vld [vmem:[#allocation3 + $0x138] sm:$0xff]
    %v106 = vld [vmem:[#allocation3 + $0x140] sm:$0xff]
    %v107 = vld [vmem:[#allocation3 + $0x148] sm:$0xff]
    %v108 = vld [vmem:[#allocation3 + $0x150] sm:$0xff]
    %v109 = vld [vmem:[#allocation3 + $0x158] sm:$0xff]
    %v110 = vld [vmem:[#allocation3 + $0x160] sm:$0xff]
    %v111 = vld [vmem:[#allocation3 + $0x168] sm:$0x3]
    %v112 = vld [vmem:[%s1] sm:$0xff]
    %v113 = vld [vmem:[%s1 + $0x8] sm:$0xff]
    %v114 = vld [vmem:[%s1 + $0x10] sm:$0xff]
    %v115 = vld [vmem:[%s1 + $0x18] sm:$0xff]
    %v116 = vld [vmem:[%s1 + $0x20] sm:$0xff]
    %v117 = vld [vmem:[%s1 + $0x28] sm:$0xff]
    %v118 = vld [vmem:[%s1 + $0x30] sm:$0xff]
    %v119 = vld [vmem:[%s1 + $0x38] sm:$0xff]
    %v120 = vld [vmem:[%s1 + $0x40] sm:$0xff]
    %v121 = vld [vmem:[%s1 + $0x48] sm:$0xff]
    %v122 = vld [vmem:[%s1 + $0x50] sm:$0xff]
    %v123 = vld [vmem:[%s1 + $0x58] sm:$0xff]
    %v124 = vld [vmem:[%s1 + $0x60] sm:$0xff]
    %v125 = vld [vmem:[%s1 + $0x68] sm:$0xff]
    %v126 = vld [vmem:[%s1 + $0x70] sm:$0xff]
    %v127 = vld [vmem:[%s1 + $0x78] sm:$0xff]
    %129 = vset.pattern.permute.xlu0 0
    %130 = vperm.xlu0 %129, %v50
    %v131 = vpop.permute.xlu0 %130
    %134 = vset.pattern.permute.xlu0 0
    %135 = vperm.xlu0 %134, %v51
    %v136 = vpop.permute.xlu0 %135
    %139 = vset.pattern.permute.xlu0 0
    %140 = vperm.xlu0 %139, %v52
    %v141 = vpop.permute.xlu0 %140
    %144 = vset.pattern.permute.xlu0 0
    %145 = vperm.xlu0 %144, %v53
    %v146 = vpop.permute.xlu0 %145
    %149 = vset.pattern.permute.xlu0 0
    %150 = vperm.xlu0 %149, %v54
    %v151 = vpop.permute.xlu0 %150
    %154 = vset.pattern.permute.xlu0 0
    %155 = vperm.xlu0 %154, %v55
    %v156 = vpop.permute.xlu0 %155
    %159 = vset.pattern.permute.xlu0 0
    %160 = vperm.xlu0 %159, %v56
    %v161 = vpop.permute.xlu0 %160
    %164 = vset.pattern.permute.xlu0 0
    %165 = vperm.xlu0 %164, %v57
    %v166 = vpop.permute.xlu0 %165
    %169 = vset.pattern.permute.xlu0 0
    %170 = vperm.xlu0 %169, %v58
    %v171 = vpop.permute.xlu0 %170
    %174 = vset.pattern.permute.xlu0 0
    %175 = vperm.xlu0 %174, %v59
    %v176 = vpop.permute.xlu0 %175
    %179 = vset.pattern.permute.xlu0 0
    %180 = vperm.xlu0 %179, %v60
    %v181 = vpop.permute.xlu0 %180
    %184 = vset.pattern.permute.xlu0 0
    %185 = vperm.xlu0 %184, %v61
    %v186 = vpop.permute.xlu0 %185
    %189 = vset.pattern.permute.xlu0 0
    %190 = vperm.xlu0 %189, %v62
    %v191 = vpop.permute.xlu0 %190
    %194 = vset.pattern.permute.xlu0 0
    %195 = vperm.xlu0 %194, %v63
    %v196 = vpop.permute.xlu0 %195
    %199 = vset.pattern.permute.xlu0 0
    %200 = vperm.xlu0 %199, %v64
    %v201 = vpop.permute.xlu0 %200
    %204 = vset.pattern.permute.xlu0 0
    %205 = vperm.xlu0 %204, %v65
    %v206 = vpop.permute.xlu0 %205
    %v208 = vsub.f32 %v112, %v131
    %v209 = vsub.f32 %v113, %v136
    %v210 = vsub.f32 %v114, %v141
    %v211 = vsub.f32 %v115, %v146
    %v212 = vsub.f32 %v116, %v151
    %v213 = vsub.f32 %v117, %v156
    %v214 = vsub.f32 %v118, %v161
    %v215 = vsub.f32 %v119, %v166
    %v216 = vsub.f32 %v120, %v171
    %v217 = vsub.f32 %v121, %v176
    %v218 = vsub.f32 %v122, %v181
    %v219 = vsub.f32 %v123, %v186
    %v220 = vsub.f32 %v124, %v191
    %v221 = vsub.f32 %v125, %v196
    %v222 = vsub.f32 %v126, %v201
    %v223 = vsub.f32 %v127, %v206
    %v224 = vstv %s49
    %v225 = vmul.f32 %v208, %v224
    %v226 = vmul.f32 %v209, %v224
    %v227 = vmul.f32 %v210, %v224
    %v228 = vmul.f32 %v211, %v224
    %v229 = vmul.f32 %v212, %v224
    %v230 = vmul.f32 %v213, %v224
    %v231 = vmul.f32 %v214, %v224
    %v232 = vmul.f32 %v215, %v224
    %v233 = vmul.f32 %v216, %v224
    %v234 = vmul.f32 %v217, %v224
    %v235 = vmul.f32 %v218, %v224
    %v236 = vmul.f32 %v219, %v224
    %v237 = vmul.f32 %v220, %v224
    %v238 = vmul.f32 %v221, %v224
    %v239 = vmul.f32 %v222, %v224
    %v240 = vmul.f32 %v223, %v224
    %v241 = vadd.f32 %v131, %v225
    %v242 = vadd.f32 %v136, %v226
    %v243 = vadd.f32 %v141, %v227
    %v244 = vadd.f32 %v146, %v228
    %v245 = vadd.f32 %v151, %v229
    %v246 = vadd.f32 %v156, %v230
    %v247 = vadd.f32 %v161, %v231
    %v248 = vadd.f32 %v166, %v232
    %v249 = vadd.f32 %v171, %v233
    %v250 = vadd.f32 %v176, %v234
    %v251 = vadd.f32 %v181, %v235
    %v252 = vadd.f32 %v186, %v236
    %v253 = vadd.f32 %v191, %v237
    %v254 = vadd.f32 %v196, %v238
    %v255 = vadd.f32 %v201, %v239
    %v256 = vadd.f32 %v206, %v240
    %257 = vset.pattern.permute.xlu0 1
    %258 = vperm.xlu0 %257, %v50
    %v259 = vpop.permute.xlu0 %258
    %261 = vset.pattern.permute.xlu0 1
    %262 = vperm.xlu0 %261, %v51
    %v263 = vpop.permute.xlu0 %262
    %265 = vset.pattern.permute.xlu0 1
    %266 = vperm.xlu0 %265, %v52
    %v267 = vpop.permute.xlu0 %266
    %269 = vset.pattern.permute.xlu0 1
    %270 = vperm.xlu0 %269, %v53
    %v271 = vpop.permute.xlu0 %270
    %273 = vset.pattern.permute.xlu0 1
    %274 = vperm.xlu0 %273, %v54
    %v275 = vpop.permute.xlu0 %274
    %277 = vset.pattern.permute.xlu0 1
    %278 = vperm.xlu0 %277, %v55
    %v279 = vpop.permute.xlu0 %278
    %281 = vset.pattern.permute.xlu0 1
    %282 = vperm.xlu0 %281, %v56
    %v283 = vpop.permute.xlu0 %282
    %285 = vset.pattern.permute.xlu0 1
    %286 = vperm.xlu0 %285, %v57
    %v287 = vpop.permute.xlu0 %286
    %289 = vset.pattern.permute.xlu0 1
    %290 = vperm.xlu0 %289, %v58
    %v291 = vpop.permute.xlu0 %290
    %293 = vset.pattern.permute.xlu0 1
    %294 = vperm.xlu0 %293, %v59
    %v295 = vpop.permute.xlu0 %294
    %297 = vset.pattern.permute.xlu0 1
    %298 = vperm.xlu0 %297, %v60
    %v299 = vpop.permute.xlu0 %298
    %301 = vset.pattern.permute.xlu0 1
    %302 = vperm.xlu0 %301, %v61
    %v303 = vpop.permute.xlu0 %302
    %305 = vset.pattern.permute.xlu0 1
    %306 = vperm.xlu0 %305, %v62
    %v307 = vpop.permute.xlu0 %306
    %309 = vset.pattern.permute.xlu0 1
    %310 = vperm.xlu0 %309, %v63
    %v311 = vpop.permute.xlu0 %310
    %313 = vset.pattern.permute.xlu0 1
    %314 = vperm.xlu0 %313, %v64
    %v315 = vpop.permute.xlu0 %314
    %317 = vset.pattern.permute.xlu0 1
    %318 = vperm.xlu0 %317, %v65
    %v319 = vpop.permute.xlu0 %318
    %321 = vmatprep.subr.mxu0 0.0
    %322 = vmatpush1.msra.mxu0 %v241
    %323 = vmatprep.subr.mxu0 0.0
    %324 = vmatpush1.msra.mxu0 %v242
    %325 = vmatprep.subr.mxu0 0.0
    %326 = vmatpush1.msra.mxu0 %v243
    %327 = vmatprep.subr.mxu0 0.0
    %328 = vmatpush1.msra.mxu0 %v244
    %329 = vmatprep.subr.mxu0 0.0
    %330 = vmatpush1.msra.mxu0 %v245
    %331 = vmatprep.subr.mxu0 0.0
    %332 = vmatpush1.msra.mxu0 %v246
    %333 = vmatprep.subr.mxu0 0.0
    %334 = vmatpush1.msra.mxu0 %v247
    %335 = vmatprep.subr.mxu0 0.0
    %336 = vmatpush1.msra.mxu0 %v248
    %337 = vmatprep.subr.mxu0 0.0
    %338 = vmatpush1.msra.mxu0 %v249
    %339 = vmatprep.subr.mxu0 0.0
    %340 = vmatpush1.msra.mxu0 %v250
    %341 = vmatprep.subr.mxu0 0.0
    %342 = vmatpush1.msra.mxu0 %v251
    %343 = vmatprep.subr.mxu0 0.0
    %344 = vmatpush1.msra.mxu0 %v252
    %345 = vmatprep.subr.mxu0 0.0
    %346 = vmatpush1.msra.mxu0 %v253
    %347 = vmatprep.subr.mxu0 0.0
    %348 = vmatpush1.msra.mxu0 %v254
    %349 = vmatprep.subr.mxu0 0.0
    %350 = vmatpush1.msra.mxu0 %v255
    %351 = vmatprep.subr.mxu0 0.0
    %352 = vmatpush1.msra.mxu0 %v256
    %353 = vmatprep.subr.mxu0 0.0
    %354 = vmatpush1.msra.mxu0 0.0
    %355 = vmatprep.subr.mxu0 0.0
    %356 = vmatpush1.msra.mxu0 0.0
    %357 = vmatprep.subr.mxu0 0.0
    %358 = vmatpush1.msra.mxu0 0.0
    %359 = vmatprep.subr.mxu0 0.0
    %360 = vmatpush1.msra.mxu0 0.0
    %361 = vmatprep.subr.mxu0 0.0
    %362 = vmatpush1.msra.mxu0 0.0
    %363 = vmatprep.subr.mxu0 0.0
    %364 = vmatpush1.msra.mxu0 0.0
    %365 = vmatprep.subr.mxu0 0.0
    %366 = vmatpush1.msra.mxu0 0.0
    %367 = vmatprep.subr.mxu0 0.0
    %368 = vmatpush1.msra.mxu0 0.0
    %369 = vmatprep.subr.mxu0 0.0
    %370 = vmatpush1.msra.mxu0 0.0
    %371 = vmatprep.subr.mxu0 0.0
    %372 = vmatpush1.msra.mxu0 0.0
    %373 = vmatprep.subr.mxu0 0.0
    %374 = vmatpush1.msra.mxu0 0.0
    %375 = vmatprep.subr.mxu0 0.0
    %376 = vmatpush1.msra.mxu0 0.0
    %377 = vmatprep.subr.mxu0 0.0
    %378 = vmatpush1.msra.mxu0 0.0
    %379 = vmatprep.subr.mxu0 0.0
    %380 = vmatpush1.msra.mxu0 0.0
    %381 = vmatprep.subr.mxu0 0.0
    %382 = vmatpush1.msra.mxu0 0.0
    %383 = vmatprep.subr.mxu0 0.0
    %384 = vmatpush1.msra.mxu0 0.0
    %385 = vmatprep.mubr.f32.mxu0 0.0
    %386 = vmatmul.mubr.f32.gmra.mrb[0].mxu0 %v66
    %v387 = vpop.f32.mrb[0].mxu0
    %v388 = vadd.f32 %v259, %v387
    %v389 = vpop.f32.mrb[0].mxu0
    %390 = vmatprep.mubr.f32.mxu0 0.0
    %391 = vmatmul.mubr.f32.gmra.mrb[0].mxu0 %v67
    %v392 = vpop.f32.mrb[0].mxu0
    %v393 = vadd.f32 %v263, %v392
    %v394 = vpop.f32.mrb[0].mxu0
    %395 = vmatprep.mubr.f32.mxu0 0.0
    %396 = vmatmul.mubr.f32.gmra.mrb[0].mxu0 %v68
    %v397 = vpop.f32.mrb[0].mxu0
    %v398 = vadd.f32 %v267, %v397
    %v399 = vpop.f32.mrb[0].mxu0
    %400 = vmatprep.mubr.f32.mxu0 0.0
    %401 = vmatmul.mubr.f32.gmra.mrb[0].mxu0 %v69
    %v402 = vpop.f32.mrb[0].mxu0
    %v403 = vadd.f32 %v271, %v402
    %v404 = vpop.f32.mrb[0].mxu0
    %405 = vmatprep.mubr.f32.mxu0 0.0
    %406 = vmatmul.mubr.f32.gmra.mrb[0].mxu0 %v70
    %v407 = vpop.f32.mrb[0].mxu0
    %v408 = vadd.f32 %v275, %v407
    %v409 = vpop.f32.mrb[0].mxu0
    %410 = vmatprep.mubr.f32.mxu0 0.0
    %411 = vmatmul.mubr.f32.gmra.mrb[0].mxu0 %v71
    %v412 = vpop.f32.mrb[0].mxu0
    %v413 = vadd.f32 %v279, %v412
    %v414 = vpop.f32.mrb[0].mxu0
    %415 = vmatprep.mubr.f32.mxu0 0.0
    %416 = vmatmul.mubr.f32.gmra.mrb[0].mxu0 %v72
    %v417 = vpop.f32.mrb[0].mxu0
    %v418 = vadd.f32 %v283, %v417
    %v419 = vpop.f32.mrb[0].mxu0
    %420 = vmatprep.mubr.f32.mxu0 0.0
    %421 = vmatmul.mubr.f32.gmra.mrb[0].mxu0 %v73
    %v422 = vpop.f32.mrb[0].mxu0
    %v423 = vadd.f32 %v287, %v422
    %v424 = vpop.f32.mrb[0].mxu0
    %425 = vmatprep.mubr.f32.mxu0 0.0
    %426 = vmatmul.mubr.f32.gmra.mrb[0].mxu0 %v74
    %v427 = vpop.f32.mrb[0].mxu0
    %v428 = vadd.f32 %v291, %v427
    %v429 = vpop.f32.mrb[0].mxu0
    %430 = vmatprep.mubr.f32.mxu0 0.0
    %431 = vmatmul.mubr.f32.gmra.mrb[0].mxu0 %v75
    %v432 = vpop.f32.mrb[0].mxu0
    %v433 = vadd.f32 %v295, %v432
    %v434 = vpop.f32.mrb[0].mxu0
    %435 = vmatprep.mubr.f32.mxu0 0.0
    %436 = vmatmul.mubr.f32.gmra.mrb[0].mxu0 %v76
    %v437 = vpop.f32.mrb[0].mxu0
    %v438 = vadd.f32 %v299, %v437
    %v439 = vpop.f32.mrb[0].mxu0
    %440 = vmatprep.mubr.f32.mxu0 0.0
    %441 = vmatmul.mubr.f32.gmra.mrb[0].mxu0 %v77
    %v442 = vpop.f32.mrb[0].mxu0
    %v443 = vadd.f32 %v303, %v442
    %v444 = vpop.f32.mrb[0].mxu0
    %445 = vmatprep.mubr.f32.mxu0 0.0
    %446 = vmatmul.mubr.f32.gmra.mrb[0].mxu0 %v78
    %v447 = vpop.f32.mrb[0].mxu0
    %v448 = vadd.f32 %v307, %v447
    %v449 = vpop.f32.mrb[0].mxu0
    %450 = vmatprep.mubr.f32.mxu0 0.0
    %451 = vmatmul.mubr.f32.gmra.mrb[0].mxu0 %v79
    %v452 = vpop.f32.mrb[0].mxu0
    %v453 = vadd.f32 %v311, %v452
    %v454 = vpop.f32.mrb[0].mxu0
    %455 = vmatprep.mubr.f32.mxu0 0.0
    %456 = vmatmul.mubr.f32.gmra.mrb[0].mxu0 %v80
    %v457 = vpop.f32.mrb[0].mxu0
    %v458 = vadd.f32 %v315, %v457
    %v459 = vpop.f32.mrb[0].mxu0
    %460 = vmatprep.mubr.f32.mxu0 0.0
    %461 = vmatmul.mubr.f32.gmra.mrb[0].mxu0 %v81
    %v462 = vpop.f32.mrb[0].mxu0
    %v463 = vadd.f32 %v319, %v462
    %v464 = vpop.f32.mrb[0].mxu0
    %465 = vdwg.mxu0
    %v466 = vmul.f32 %v388, %v388
    %v467 = vmul.f32 %v393, %v393
    %v468 = vmul.f32 %v398, %v398
    %v469 = vmul.f32 %v403, %v403
    %v470 = vmul.f32 %v408, %v408
    %v471 = vmul.f32 %v413, %v413
    %v472 = vmul.f32 %v418, %v418
    %v473 = vmul.f32 %v423, %v423
    %v474 = vmul.f32 %v428, %v428
    %v475 = vmul.f32 %v433, %v433
    %v476 = vmul.f32 %v438, %v438
    %v477 = vmul.f32 %v443, %v443
    %v478 = vmul.f32 %v448, %v448
    %v479 = vmul.f32 %v453, %v453
    %v480 = vmul.f32 %v458, %v458
    %v481 = vmul.f32 %v463, %v463
    %482 = vmatprep.subr.mxu0 0.0
    %483 = vmatpush1.msra.mxu0 %v466
    %484 = vmatprep.subr.mxu0 0.0
    %485 = vmatpush1.msra.mxu0 %v467
    %486 = vmatprep.subr.mxu0 0.0
    %487 = vmatpush1.msra.mxu0 %v468
    %488 = vmatprep.subr.mxu0 0.0
    %489 = vmatpush1.msra.mxu0 %v469
    %490 = vmatprep.subr.mxu0 0.0
    %491 = vmatpush1.msra.mxu0 %v470
    %492 = vmatprep.subr.mxu0 0.0
    %493 = vmatpush1.msra.mxu0 %v471
    %494 = vmatprep.subr.mxu0 0.0
    %495 = vmatpush1.msra.mxu0 %v472
    %496 = vmatprep.subr.mxu0 0.0
    %497 = vmatpush1.msra.mxu0 %v473
    %498 = vmatprep.subr.mxu0 0.0
    %499 = vmatpush1.msra.mxu0 %v474
    %500 = vmatprep.subr.mxu0 0.0
    %501 = vmatpush1.msra.mxu0 %v475
    %502 = vmatprep.subr.mxu0 0.0
    %503 = vmatpush1.msra.mxu0 %v476
    %504 = vmatprep.subr.mxu0 0.0
    %505 = vmatpush1.msra.mxu0 %v477
    %506 = vmatprep.subr.mxu0 0.0
    %507 = vmatpush1.msra.mxu0 %v478
    %508 = vmatprep.subr.mxu0 0.0
    %509 = vmatpush1.msra.mxu0 %v479
    %510 = vmatprep.subr.mxu0 0.0
    %511 = vmatpush1.msra.mxu0 %v480
    %512 = vmatprep.subr.mxu0 0.0
    %513 = vmatpush1.msra.mxu0 %v481
    %514 = vmatprep.subr.mxu0 0.0
    %515 = vmatpush1.msra.mxu0 0.0
    %516 = vmatprep.subr.mxu0 0.0
    %517 = vmatpush1.msra.mxu0 0.0
    %518 = vmatprep.subr.mxu0 0.0
    %519 = vmatpush1.msra.mxu0 0.0
    %520 = vmatprep.subr.mxu0 0.0
    %521 = vmatpush1.msra.mxu0 0.0
    %522 = vmatprep.subr.mxu0 0.0
    %523 = vmatpush1.msra.mxu0 0.0
    %524 = vmatprep.subr.mxu0 0.0
    %525 = vmatpush1.msra.mxu0 0.0
    %526 = vmatprep.subr.mxu0 0.0
    %527 = vmatpush1.msra.mxu0 0.0
    %528 = vmatprep.subr.mxu0 0.0
    %529 = vmatpush1.msra.mxu0 0.0
    %530 = vmatprep.subr.mxu0 0.0
    %531 = vmatpush1.msra.mxu0 0.0
    %532 = vmatprep.subr.mxu0 0.0
    %533 = vmatpush1.msra.mxu0 0.0
    %534 = vmatprep.subr.mxu0 0.0
    %535 = vmatpush1.msra.mxu0 0.0
    %536 = vmatprep.subr.mxu0 0.0
    %537 = vmatpush1.msra.mxu0 0.0
    %538 = vmatprep.subr.mxu0 0.0
    %539 = vmatpush1.msra.mxu0 0.0
    %540 = vmatprep.subr.mxu0 0.0
    %541 = vmatpush1.msra.mxu0 0.0
    %542 = vmatprep.subr.mxu0 0.0
    %543 = vmatpush1.msra.mxu0 0.0
    %544 = vmatprep.subr.mxu0 0.0
    %545 = vmatpush1.msra.mxu0 0.0
    %546 = vmatprep.mubr.f32.mxu0 0.0
    %547 = vmatmul.mubr.f32.gmra.mrb[0].mxu0 %v82
    %v548 = vpop.f32.mrb[0].mxu0
    %v549 = vadd.f32 1e-08, %v548
    %v550 = vpop.f32.mrb[0].mxu0
    %551 = vmatprep.mubr.f32.mxu0 0.0
    %552 = vmatmul.mubr.f32.gmra.mrb[0].mxu0 %v83
    %v553 = vpop.f32.mrb[0].mxu0
    %v554 = vadd.f32 1e-08, %v553
    %v555 = vpop.f32.mrb[0].mxu0
    %556 = vmatprep.mubr.f32.mxu0 0.0
    %557 = vmatmul.mubr.f32.gmra.mrb[0].mxu0 %v84
    %v558 = vpop.f32.mrb[0].mxu0
    %v559 = vadd.f32 1e-08, %v558
    %v560 = vpop.f32.mrb[0].mxu0
    %561 = vmatprep.mubr.f32.mxu0 0.0
    %562 = vmatmul.mubr.f32.gmra.mrb[0].mxu0 %v85
    %v563 = vpop.f32.mrb[0].mxu0
    %v564 = vadd.f32 1e-08, %v563
    %v565 = vpop.f32.mrb[0].mxu0
    %566 = vmatprep.mubr.f32.mxu0 0.0
    %567 = vmatmul.mubr.f32.gmra.mrb[0].mxu0 %v86
    %v568 = vpop.f32.mrb[0].mxu0
    %v569 = vadd.f32 1e-08, %v568
    %v570 = vpop.f32.mrb[0].mxu0
    %571 = vmatprep.mubr.f32.mxu0 0.0
    %572 = vmatmul.mubr.f32.gmra.mrb[0].mxu0 %v87
    %v573 = vpop.f32.mrb[0].mxu0
    %v574 = vadd.f32 1e-08, %v573
    %v575 = vpop.f32.mrb[0].mxu0
    %576 = vmatprep.mubr.f32.mxu0 0.0
    %577 = vmatmul.mubr.f32.gmra.mrb[0].mxu0 %v88
    %v578 = vpop.f32.mrb[0].mxu0
    %v579 = vadd.f32 1e-08, %v578
    %v580 = vpop.f32.mrb[0].mxu0
    %581 = vmatprep.mubr.f32.mxu0 0.0
    %582 = vmatmul.mubr.f32.gmra.mrb[0].mxu0 %v89
    %v583 = vpop.f32.mrb[0].mxu0
    %v584 = vadd.f32 1e-08, %v583
    %v585 = vpop.f32.mrb[0].mxu0
    %586 = vmatprep.mubr.f32.mxu0 0.0
    %587 = vmatmul.mubr.f32.gmra.mrb[0].mxu0 %v90
    %v588 = vpop.f32.mrb[0].mxu0
    %v589 = vadd.f32 1e-08, %v588
    %v590 = vpop.f32.mrb[0].mxu0
    %591 = vmatprep.mubr.f32.mxu0 0.0
    %592 = vmatmul.mubr.f32.gmra.mrb[0].mxu0 %v91
    %v593 = vpop.f32.mrb[0].mxu0
    %v594 = vadd.f32 1e-08, %v593
    %v595 = vpop.f32.mrb[0].mxu0
    %596 = vmatprep.mubr.f32.mxu0 0.0
    %597 = vmatmul.mubr.f32.gmra.mrb[0].mxu0 %v92
    %v598 = vpop.f32.mrb[0].mxu0
    %v599 = vadd.f32 1e-08, %v598
    %v600 = vpop.f32.mrb[0].mxu0
    %601 = vmatprep.mubr.f32.mxu0 0.0
    %602 = vmatmul.mubr.f32.gmra.mrb[0].mxu0 %v93
    %v603 = vpop.f32.mrb[0].mxu0
    %v604 = vadd.f32 1e-08, %v603
    %v605 = vpop.f32.mrb[0].mxu0
    %606 = vdwg.mxu0
    %v607 = vrsqrt.pop %v549
    %v608 = vrsqrt.pop %v554
    %v609 = vrsqrt.pop %v559
    %v610 = vrsqrt.pop %v564
    %v611 = vrsqrt.pop %v569
    %v612 = vrsqrt.pop %v574
    %v613 = vrsqrt.pop %v579
    %v614 = vrsqrt.pop %v584
    %v615 = vrsqrt.pop %v589
    %v616 = vrsqrt.pop %v594
    %v617 = vrsqrt.pop %v599
    %v618 = vrsqrt.pop %v604
    %vm619 = vcmask 15360
    %v621 = vsel %vm619, %v388, 0
    %v624 = vsel %vm619, %v393, 0
    %v627 = vsel %vm619, %v398, 0
    %v630 = vsel %vm619, %v403, 0
    %v633 = vsel %vm619, %v408, 0
    %v636 = vsel %vm619, %v413, 0
    %v639 = vsel %vm619, %v418, 0
    %v642 = vsel %vm619, %v423, 0
    %v645 = vsel %vm619, %v428, 0
    %v648 = vsel %vm619, %v433, 0
    %v651 = vsel %vm619, %v438, 0
    %v654 = vsel %vm619, %v443, 0
    %v657 = vsel %vm619, %v448, 0
    %v660 = vsel %vm619, %v453, 0
    %v663 = vsel %vm619, %v458, 0
    %v666 = vsel %vm619, %v463, 0
    %v669 = vsel %vm619, %v607, 0
    %v672 = vsel %vm619, %v608, 0
    %v675 = vsel %vm619, %v609, 0
    %v678 = vsel %vm619, %v610, 0
    %v681 = vsel %vm619, %v611, 0
    %v684 = vsel %vm619, %v612, 0
    %v687 = vsel %vm619, %v613, 0
    %v690 = vsel %vm619, %v614, 0
    %v693 = vsel %vm619, %v615, 0
    %v696 = vsel %vm619, %v616, 0
    %v699 = vsel %vm619, %v617, 0
    %v702 = vsel %vm619, %v618, 0
    %vm704 = vcmask 1041408
    %v706 = vsel %vm704, %v111, 0
    %708 = vmatprep.subr.mxu0 0.0
    %709 = vmatpush1.msra.mxu0 %v706
    %710 = vmatprep.subr.mxu0 0.0
    %711 = vmatpush1.msra.mxu0 0.0
    %712 = vmatprep.subr.mxu0 0.0
    %713 = vmatpush1.msra.mxu0 0.0
    %714 = vmatprep.subr.mxu0 0.0
    %715 = vmatpush1.msra.mxu0 0.0
    %716 = vmatprep.subr.mxu0 0.0
    %717 = vmatpush1.msra.mxu0 0.0
    %718 = vmatprep.subr.mxu0 0.0
    %719 = vmatpush1.msra.mxu0 0.0
    %720 = vmatprep.subr.mxu0 0.0
    %721 = vmatpush1.msra.mxu0 0.0
    %722 = vmatprep.subr.mxu0 0.0
    %723 = vmatpush1.msra.mxu0 0.0
    %724 = vmatprep.subr.mxu0 0.0
    %725 = vmatpush1.msra.mxu0 0.0
    %726 = vmatprep.subr.mxu0 0.0
    %727 = vmatpush1.msra.mxu0 0.0
    %728 = vmatprep.subr.mxu0 0.0
    %729 = vmatpush1.msra.mxu0 0.0
    %730 = vmatprep.subr.mxu0 0.0
    %731 = vmatpush1.msra.mxu0 0.0
    %732 = vmatprep.subr.mxu0 0.0
    %733 = vmatpush1.msra.mxu0 0.0
    %734 = vmatprep.subr.mxu0 0.0
    %735 = vmatpush1.msra.mxu0 0.0
    %736 = vmatprep.subr.mxu0 0.0
    %737 = vmatpush1.msra.mxu0 0.0
    %738 = vmatprep.subr.mxu0 0.0
    %739 = vmatpush1.msra.mxu0 0.0
    %740 = vmatprep.subr.mxu0 0.0
    %741 = vmatpush1.msra.mxu0 0.0
    %742 = vmatprep.subr.mxu0 0.0
    %743 = vmatpush1.msra.mxu0 0.0
    %744 = vmatprep.subr.mxu0 0.0
    %745 = vmatpush1.msra.mxu0 0.0
    %746 = vmatprep.subr.mxu0 0.0
    %747 = vmatpush1.msra.mxu0 0.0
    %748 = vmatprep.subr.mxu0 0.0
    %749 = vmatpush1.msra.mxu0 0.0
    %750 = vmatprep.subr.mxu0 0.0
    %751 = vmatpush1.msra.mxu0 0.0
    %752 = vmatprep.subr.mxu0 0.0
    %753 = vmatpush1.msra.mxu0 0.0
    %754 = vmatprep.subr.mxu0 0.0
    %755 = vmatpush1.msra.mxu0 0.0
    %756 = vmatprep.subr.mxu0 0.0
    %757 = vmatpush1.msra.mxu0 0.0
    %758 = vmatprep.subr.mxu0 0.0
    %759 = vmatpush1.msra.mxu0 0.0
    %760 = vmatprep.subr.mxu0 0.0
    %761 = vmatpush1.msra.mxu0 0.0
    %762 = vmatprep.subr.mxu0 0.0
    %763 = vmatpush1.msra.mxu0 0.0
    %764 = vmatprep.subr.mxu0 0.0
    %765 = vmatpush1.msra.mxu0 0.0
    %766 = vmatprep.subr.mxu0 0.0
    %767 = vmatpush1.msra.mxu0 0.0
    %768 = vmatprep.subr.mxu0 0.0
    %769 = vmatpush1.msra.mxu0 0.0
    %770 = vmatprep.subr.mxu0 0.0
    %771 = vmatpush1.msra.mxu0 0.0
    %772 = vmatprep.mubr.f32.mxu0 0.0
    %773 = vmatmul.mubr.f32.gmra.mrb[0].mxu0 %v621
    %v774 = vpop.f32.mrb[0].mxu0
    %v775 = vadd.f32 0.0, %v774
    %v776 = vpop.f32.mrb[0].mxu0
    %777 = vmatprep.mubr.f32.mxu0 0.0
    %778 = vmatmul.mubr.f32.gmra.mrb[0].mxu0 %v624
    %v779 = vpop.f32.mrb[0].mxu0
    %v780 = vadd.f32 0.0, %v779
    %v781 = vpop.f32.mrb[0].mxu0
    %782 = vmatprep.mubr.f32.mxu0 0.0
    %783 = vmatmul.mubr.f32.gmra.mrb[0].mxu0 %v627
    %v784 = vpop.f32.mrb[0].mxu0
    %v785 = vadd.f32 0.0, %v784
    %v786 = vpop.f32.mrb[0].mxu0
    %787 = vmatprep.mubr.f32.mxu0 0.0
    %788 = vmatmul.mubr.f32.gmra.mrb[0].mxu0 %v630
    %v789 = vpop.f32.mrb[0].mxu0
    %v790 = vadd.f32 0.0, %v789
    %v791 = vpop.f32.mrb[0].mxu0
    %792 = vmatprep.mubr.f32.mxu0 0.0
    %793 = vmatmul.mubr.f32.gmra.mrb[0].mxu0 %v633
    %v794 = vpop.f32.mrb[0].mxu0
    %v795 = vadd.f32 0.0, %v794
    %v796 = vpop.f32.mrb[0].mxu0
    %797 = vmatprep.mubr.f32.mxu0 0.0
    %798 = vmatmul.mubr.f32.gmra.mrb[0].mxu0 %v636
    %v799 = vpop.f32.mrb[0].mxu0
    %v800 = vadd.f32 0.0, %v799
    %v801 = vpop.f32.mrb[0].mxu0
    %802 = vmatprep.mubr.f32.mxu0 0.0
    %803 = vmatmul.mubr.f32.gmra.mrb[0].mxu0 %v639
    %v804 = vpop.f32.mrb[0].mxu0
    %v805 = vadd.f32 0.0, %v804
    %v806 = vpop.f32.mrb[0].mxu0
    %807 = vmatprep.mubr.f32.mxu0 0.0
    %808 = vmatmul.mubr.f32.gmra.mrb[0].mxu0 %v642
    %v809 = vpop.f32.mrb[0].mxu0
    %v810 = vadd.f32 0.0, %v809
    %v811 = vpop.f32.mrb[0].mxu0
    %812 = vmatprep.mubr.f32.mxu0 0.0
    %813 = vmatmul.mubr.f32.gmra.mrb[0].mxu0 %v645
    %v814 = vpop.f32.mrb[0].mxu0
    %v815 = vadd.f32 0.0, %v814
    %v816 = vpop.f32.mrb[0].mxu0
    %817 = vmatprep.mubr.f32.mxu0 0.0
    %818 = vmatmul.mubr.f32.gmra.mrb[0].mxu0 %v648
    %v819 = vpop.f32.mrb[0].mxu0
    %v820 = vadd.f32 0.0, %v819
    %v821 = vpop.f32.mrb[0].mxu0
    %822 = vmatprep.mubr.f32.mxu0 0.0
    %823 = vmatmul.mubr.f32.gmra.mrb[0].mxu0 %v651
    %v824 = vpop.f32.mrb[0].mxu0
    %v825 = vadd.f32 0.0, %v824
    %v826 = vpop.f32.mrb[0].mxu0
    %827 = vmatprep.mubr.f32.mxu0 0.0
    %828 = vmatmul.mubr.f32.gmra.mrb[0].mxu0 %v654
    %v829 = vpop.f32.mrb[0].mxu0
    %v830 = vadd.f32 0.0, %v829
    %v831 = vpop.f32.mrb[0].mxu0
    %832 = vmatprep.mubr.f32.mxu0 0.0
    %833 = vmatmul.mubr.f32.gmra.mrb[0].mxu0 %v657
    %v834 = vpop.f32.mrb[0].mxu0
    %v835 = vadd.f32 0.0, %v834
    %v836 = vpop.f32.mrb[0].mxu0
    %837 = vmatprep.mubr.f32.mxu0 0.0
    %838 = vmatmul.mubr.f32.gmra.mrb[0].mxu0 %v660
    %v839 = vpop.f32.mrb[0].mxu0
    %v840 = vadd.f32 0.0, %v839
    %v841 = vpop.f32.mrb[0].mxu0
    %842 = vmatprep.mubr.f32.mxu0 0.0
    %843 = vmatmul.mubr.f32.gmra.mrb[0].mxu0 %v663
    %v844 = vpop.f32.mrb[0].mxu0
    %v845 = vadd.f32 0.0, %v844
    %v846 = vpop.f32.mrb[0].mxu0
    %847 = vmatprep.mubr.f32.mxu0 0.0
    %848 = vmatmul.mubr.f32.gmra.mrb[0].mxu0 %v666
    %v849 = vpop.f32.mrb[0].mxu0
    %v850 = vadd.f32 0.0, %v849
    %v851 = vpop.f32.mrb[0].mxu0
    %852 = vmatprep.mubr.f32.mxu0 0.0
    %853 = vmatmul.mubr.f32.gmra.mrb[0].mxu0 %v669
    %v854 = vpop.f32.mrb[0].mxu0
    %v855 = vadd.f32 0.0, %v854
    %v856 = vpop.f32.mrb[0].mxu0
    %857 = vmatprep.mubr.f32.mxu0 0.0
    %858 = vmatmul.mubr.f32.gmra.mrb[0].mxu0 %v672
    %v859 = vpop.f32.mrb[0].mxu0
    %v860 = vadd.f32 0.0, %v859
    %v861 = vpop.f32.mrb[0].mxu0
    %862 = vmatprep.mubr.f32.mxu0 0.0
    %863 = vmatmul.mubr.f32.gmra.mrb[0].mxu0 %v675
    %v864 = vpop.f32.mrb[0].mxu0
    %v865 = vadd.f32 0.0, %v864
    %v866 = vpop.f32.mrb[0].mxu0
    %867 = vmatprep.mubr.f32.mxu0 0.0
    %868 = vmatmul.mubr.f32.gmra.mrb[0].mxu0 %v678
    %v869 = vpop.f32.mrb[0].mxu0
    %v870 = vadd.f32 0.0, %v869
    %v871 = vpop.f32.mrb[0].mxu0
    %872 = vmatprep.mubr.f32.mxu0 0.0
    %873 = vmatmul.mubr.f32.gmra.mrb[0].mxu0 %v681
    %v874 = vpop.f32.mrb[0].mxu0
    %v875 = vadd.f32 0.0, %v874
    %v876 = vpop.f32.mrb[0].mxu0
    %877 = vmatprep.mubr.f32.mxu0 0.0
    %878 = vmatmul.mubr.f32.gmra.mrb[0].mxu0 %v684
    %v879 = vpop.f32.mrb[0].mxu0
    %v880 = vadd.f32 0.0, %v879
    %v881 = vpop.f32.mrb[0].mxu0
    %882 = vmatprep.mubr.f32.mxu0 0.0
    %883 = vmatmul.mubr.f32.gmra.mrb[0].mxu0 %v687
    %v884 = vpop.f32.mrb[0].mxu0
    %v885 = vadd.f32 0.0, %v884
    %v886 = vpop.f32.mrb[0].mxu0
    %887 = vmatprep.mubr.f32.mxu0 0.0
    %888 = vmatmul.mubr.f32.gmra.mrb[0].mxu0 %v690
    %v889 = vpop.f32.mrb[0].mxu0
    %v890 = vadd.f32 0.0, %v889
    %v891 = vpop.f32.mrb[0].mxu0
    %892 = vmatprep.mubr.f32.mxu0 0.0
    %893 = vmatmul.mubr.f32.gmra.mrb[0].mxu0 %v693
    %v894 = vpop.f32.mrb[0].mxu0
    %v895 = vadd.f32 0.0, %v894
    %v896 = vpop.f32.mrb[0].mxu0
    %897 = vmatprep.mubr.f32.mxu0 0.0
    %898 = vmatmul.mubr.f32.gmra.mrb[0].mxu0 %v696
    %v899 = vpop.f32.mrb[0].mxu0
    %v900 = vadd.f32 0.0, %v899
    %v901 = vpop.f32.mrb[0].mxu0
    %902 = vmatprep.mubr.f32.mxu0 0.0
    %903 = vmatmul.mubr.f32.gmra.mrb[0].mxu0 %v699
    %v904 = vpop.f32.mrb[0].mxu0
    %v905 = vadd.f32 0.0, %v904
    %v906 = vpop.f32.mrb[0].mxu0
    %907 = vmatprep.mubr.f32.mxu0 0.0
    %908 = vmatmul.mubr.f32.gmra.mrb[0].mxu0 %v702
    %v909 = vpop.f32.mrb[0].mxu0
    %v910 = vadd.f32 0.0, %v909
    %v911 = vpop.f32.mrb[0].mxu0
    %912 = vdwg.mxu0
    %v913 = vmul.f32 %v107, %v775
    %v914 = vmul.f32 %v108, %v780
    %v915 = vmul.f32 %v109, %v785
    %v916 = vmul.f32 %v110, %v790
    %vm917 = vcmask 261120
    %v919 = vsel %vm917, %v94, 0
    %v922 = vsel %vm917, %v95, 0
    %v925 = vsel %vm917, %v96, 0
    %v928 = vsel %vm917, %v97, 0
    %930 = vmatprep.subr.mxu0 0.0
    %931 = vmatpush1.msra.mxu0 %v913
    %932 = vmatprep.subr.mxu0 0.0
    %933 = vmatpush1.msra.mxu0 %v914
    %934 = vmatprep.subr.mxu0 0.0
    %935 = vmatpush1.msra.mxu0 %v915
    %936 = vmatprep.subr.mxu0 0.0
    %937 = vmatpush1.msra.mxu0 %v916
    %938 = vmatprep.subr.mxu0 0.0
    %939 = vmatpush1.msra.mxu0 0.0
    %940 = vmatprep.subr.mxu0 0.0
    %941 = vmatpush1.msra.mxu0 0.0
    %942 = vmatprep.subr.mxu0 0.0
    %943 = vmatpush1.msra.mxu0 0.0
    %944 = vmatprep.subr.mxu0 0.0
    %945 = vmatpush1.msra.mxu0 0.0
    %946 = vmatprep.subr.mxu0 0.0
    %947 = vmatpush1.msra.mxu0 0.0
    %948 = vmatprep.subr.mxu0 0.0
    %949 = vmatpush1.msra.mxu0 0.0
    %950 = vmatprep.subr.mxu0 0.0
    %951 = vmatpush1.msra.mxu0 0.0
    %952 = vmatprep.subr.mxu0 0.0
    %953 = vmatpush1.msra.mxu0 0.0
    %954 = vmatprep.subr.mxu0 0.0
    %955 = vmatpush1.msra.mxu0 0.0
    %956 = vmatprep.subr.mxu0 0.0
    %957 = vmatpush1.msra.mxu0 0.0
    %958 = vmatprep.subr.mxu0 0.0
    %959 = vmatpush1.msra.mxu0 0.0
    %960 = vmatprep.subr.mxu0 0.0
    %961 = vmatpush1.msra.mxu0 0.0
    %962 = vmatprep.subr.mxu0 0.0
    %963 = vmatpush1.msra.mxu0 0.0
    %964 = vmatprep.subr.mxu0 0.0
    %965 = vmatpush1.msra.mxu0 0.0
    %966 = vmatprep.subr.mxu0 0.0
    %967 = vmatpush1.msra.mxu0 0.0
    %968 = vmatprep.subr.mxu0 0.0
    %969 = vmatpush1.msra.mxu0 0.0
    %970 = vmatprep.subr.mxu0 0.0
    %971 = vmatpush1.msra.mxu0 0.0
    %972 = vmatprep.subr.mxu0 0.0
    %973 = vmatpush1.msra.mxu0 0.0
    %974 = vmatprep.subr.mxu0 0.0
    %975 = vmatpush1.msra.mxu0 0.0
    %976 = vmatprep.subr.mxu0 0.0
    %977 = vmatpush1.msra.mxu0 0.0
    %978 = vmatprep.subr.mxu0 0.0
    %979 = vmatpush1.msra.mxu0 0.0
    %980 = vmatprep.subr.mxu0 0.0
    %981 = vmatpush1.msra.mxu0 0.0
    %982 = vmatprep.subr.mxu0 0.0
    %983 = vmatpush1.msra.mxu0 0.0
    %984 = vmatprep.subr.mxu0 0.0
    %985 = vmatpush1.msra.mxu0 0.0
    %986 = vmatprep.subr.mxu0 0.0
    %987 = vmatpush1.msra.mxu0 0.0
    %988 = vmatprep.subr.mxu0 0.0
    %989 = vmatpush1.msra.mxu0 0.0
    %990 = vmatprep.subr.mxu0 0.0
    %991 = vmatpush1.msra.mxu0 0.0
    %992 = vmatprep.subr.mxu0 0.0
    %993 = vmatpush1.msra.mxu0 0.0
    %994 = vmatprep.mubr.f32.mxu0 0.0
    %995 = vmatmul.mubr.f32.gmra.mrb[0].mxu0 %v919
    %v996 = vpop.f32.mrb[0].mxu0
    %v997 = vadd.f32 0.0, %v996
    %v998 = vpop.f32.mrb[0].mxu0
    %999 = vmatprep.mubr.f32.mxu0 0.0
    %1000 = vmatmul.mubr.f32.gmra.mrb[0].mxu0 %v922
    %v1001 = vpop.f32.mrb[0].mxu0
    %v1002 = vadd.f32 0.0, %v1001
    %v1003 = vpop.f32.mrb[0].mxu0
    %1004 = vmatprep.mubr.f32.mxu0 0.0
    %1005 = vmatmul.mubr.f32.gmra.mrb[0].mxu0 %v925
    %v1006 = vpop.f32.mrb[0].mxu0
    %v1007 = vadd.f32 0.0, %v1006
    %v1008 = vpop.f32.mrb[0].mxu0
    %1009 = vmatprep.mubr.f32.mxu0 0.0
    %1010 = vmatmul.mubr.f32.gmra.mrb[0].mxu0 %v928
    %v1011 = vpop.f32.mrb[0].mxu0
    %v1012 = vadd.f32 0.0, %v1011
    %v1013 = vpop.f32.mrb[0].mxu0
    %1014 = vdwg.mxu0
    %v1015 = vmul.f32 %v997, %v855
    %v1016 = vmul.f32 %v1002, %v860
    %v1017 = vmul.f32 %v1007, %v865
    %v1018 = vmul.f32 %v1012, %v870
    %1019 = vset.pattern.permute.xlu0 2
    %1020 = vperm.xlu0 %1019, %v50
    %v1021 = vpop.permute.xlu0 %1020
    %1023 = vset.pattern.permute.xlu0 2
    %1024 = vperm.xlu0 %1023, %v51
    %v1025 = vpop.permute.xlu0 %1024
    %1027 = vset.pattern.permute.xlu0 2
    %1028 = vperm.xlu0 %1027, %v52
    %v1029 = vpop.permute.xlu0 %1028
    %1031 = vset.pattern.permute.xlu0 2
    %1032 = vperm.xlu0 %1031, %v53
    %v1033 = vpop.permute.xlu0 %1032
    %v1035 = vadd.f32 %v1015, %v1021
    %v1036 = vadd.f32 %v1016, %v1025
    %v1037 = vadd.f32 %v1017, %v1029
    %v1038 = vadd.f32 %v1018, %v1033
    %vm1039 = vcmp.ge.f32.partialorder %v1035, 0.0
    %vm1040 = vcmp.ge.f32.partialorder %v1036, 0.0
    %vm1041 = vcmp.ge.f32.partialorder %v1037, 0.0
    %vm1042 = vcmp.ge.f32.partialorder %v1038, 0.0
    %v1043 = vmul.f32 %v1035, 0.2
    %v1044 = vmul.f32 %v1036, 0.2
    %v1045 = vmul.f32 %v1037, 0.2
    %v1046 = vmul.f32 %v1038, 0.2
    %v1047 = vsel %vm1039, %v1035, %v1043
    %v1048 = vsel %vm1040, %v1036, %v1044
    %v1049 = vsel %vm1041, %v1037, %v1045
    %v1050 = vsel %vm1042, %v1038, %v1046
    %v1051 = vmul.f32 %v1047, 1.4142135
    %v1052 = vmul.f32 %v1048, 1.4142135
    %v1053 = vmul.f32 %v1049, 1.4142135
    %v1054 = vmul.f32 %v1050, 1.4142135
    %v1055 = vmul.f32 %v1051, %v795
    %v1056 = vmul.f32 %v1052, %v800
    %v1057 = vmul.f32 %v1053, %v805
    %v1058 = vmul.f32 %v1054, %v810
    %v1060 = vsel %vm917, %v98, 0
    %v1063 = vsel %vm917, %v99, 0
    %v1066 = vsel %vm917, %v100, 0
    %v1069 = vsel %vm917, %v101, 0
    %1071 = vmatprep.subr.mxu0 0.0
    %1072 = vmatpush1.msra.mxu0 %v1055
    %1073 = vmatprep.subr.mxu0 0.0
    %1074 = vmatpush1.msra.mxu0 %v1056
    %1075 = vmatprep.subr.mxu0 0.0
    %1076 = vmatpush1.msra.mxu0 %v1057
    %1077 = vmatprep.subr.mxu0 0.0
    %1078 = vmatpush1.msra.mxu0 %v1058
    %1079 = vmatprep.subr.mxu0 0.0
    %1080 = vmatpush1.msra.mxu0 0.0
    %1081 = vmatprep.subr.mxu0 0.0
    %1082 = vmatpush1.msra.mxu0 0.0
    %1083 = vmatprep.subr.mxu0 0.0
    %1084 = vmatpush1.msra.mxu0 0.0
    %1085 = vmatprep.subr.mxu0 0.0
    %1086 = vmatpush1.msra.mxu0 0.0
    %1087 = vmatprep.subr.mxu0 0.0
    %1088 = vmatpush1.msra.mxu0 0.0
    %1089 = vmatprep.subr.mxu0 0.0
    %1090 = vmatpush1.msra.mxu0 0.0
    %1091 = vmatprep.subr.mxu0 0.0
    %1092 = vmatpush1.msra.mxu0 0.0
    %1093 = vmatprep.subr.mxu0 0.0
    %1094 = vmatpush1.msra.mxu0 0.0
    %1095 = vmatprep.subr.mxu0 0.0
    %1096 = vmatpush1.msra.mxu0 0.0
    %1097 = vmatprep.subr.mxu0 0.0
    %1098 = vmatpush1.msra.mxu0 0.0
    %1099 = vmatprep.subr.mxu0 0.0
    %1100 = vmatpush1.msra.mxu0 0.0
    %1101 = vmatprep.subr.mxu0 0.0
    %1102 = vmatpush1.msra.mxu0 0.0
    %1103 = vmatprep.subr.mxu0 0.0
    %1104 = vmatpush1.msra.mxu0 0.0
    %1105 = vmatprep.subr.mxu0 0.0
    %1106 = vmatpush1.msra.mxu0 0.0
    %1107 = vmatprep.subr.mxu0 0.0
    %1108 = vmatpush1.msra.mxu0 0.0
    %1109 = vmatprep.subr.mxu0 0.0
    %1110 = vmatpush1.msra.mxu0 0.0
    %1111 = vmatprep.subr.mxu0 0.0
    %1112 = vmatpush1.msra.mxu0 0.0
    %1113 = vmatprep.subr.mxu0 0.0
    %1114 = vmatpush1.msra.mxu0 0.0
    %1115 = vmatprep.subr.mxu0 0.0
    %1116 = vmatpush1.msra.mxu0 0.0
    %1117 = vmatprep.subr.mxu0 0.0
    %1118 = vmatpush1.msra.mxu0 0.0
    %1119 = vmatprep.subr.mxu0 0.0
    %1120 = vmatpush1.msra.mxu0 0.0
    %1121 = vmatprep.subr.mxu0 0.0
    %1122 = vmatpush1.msra.mxu0 0.0
    %1123 = vmatprep.subr.mxu0 0.0
    %1124 = vmatpush1.msra.mxu0 0.0
    %1125 = vmatprep.subr.mxu0 0.0
    %1126 = vmatpush1.msra.mxu0 0.0
    %1127 = vmatprep.subr.mxu0 0.0
    %1128 = vmatpush1.msra.mxu0 0.0
    %1129 = vmatprep.subr.mxu0 0.0
    %1130 = vmatpush1.msra.mxu0 0.0
    %1131 = vmatprep.subr.mxu0 0.0
    %1132 = vmatpush1.msra.mxu0 0.0
    %1133 = vmatprep.subr.mxu0 0.0
    %1134 = vmatpush1.msra.mxu0 0.0
    %1135 = vmatprep.mubr.f32.mxu0 0.0
    %1136 = vmatmul.mubr.f32.gmra.mrb[0].mxu0 %v1060
    %v1137 = vpop.f32.mrb[0].mxu0
    %v1138 = vadd.f32 0.0, %v1137
    %v1139 = vpop.f32.mrb[0].mxu0
    %1140 = vmatprep.mubr.f32.mxu0 0.0
    %1141 = vmatmul.mubr.f32.gmra.mrb[0].mxu0 %v1063
    %v1142 = vpop.f32.mrb[0].mxu0
    %v1143 = vadd.f32 0.0, %v1142
    %v1144 = vpop.f32.mrb[0].mxu0
    %1145 = vmatprep.mubr.f32.mxu0 0.0
    %1146 = vmatmul.mubr.f32.gmra.mrb[0].mxu0 %v1066
    %v1147 = vpop.f32.mrb[0].mxu0
    %v1148 = vadd.f32 0.0, %v1147
    %v1149 = vpop.f32.mrb[0].mxu0
    %1150 = vmatprep.mubr.f32.mxu0 0.0
    %1151 = vmatmul.mubr.f32.gmra.mrb[0].mxu0 %v1069
    %v1152 = vpop.f32.mrb[0].mxu0
    %v1153 = vadd.f32 0.0, %v1152
    %v1154 = vpop.f32.mrb[0].mxu0
    %1155 = vdwg.mxu0
    %v1156 = vmul.f32 %v1138, %v875
    %v1157 = vmul.f32 %v1143, %v880
    %v1158 = vmul.f32 %v1148, %v885
    %v1159 = vmul.f32 %v1153, %v890
    %1160 = vset.pattern.permute.xlu0 2
    %1161 = vperm.xlu0 %1160, %v54
    %v1162 = vpop.permute.xlu0 %1161
    %1164 = vset.pattern.permute.xlu0 2
    %1165 = vperm.xlu0 %1164, %v55
    %v1166 = vpop.permute.xlu0 %1165
    %1168 = vset.pattern.permute.xlu0 2
    %1169 = vperm.xlu0 %1168, %v56
    %v1170 = vpop.permute.xlu0 %1169
    %1172 = vset.pattern.permute.xlu0 2
    %1173 = vperm.xlu0 %1172, %v57
    %v1174 = vpop.permute.xlu0 %1173
    %v1176 = vadd.f32 %v1156, %v1162
    %v1177 = vadd.f32 %v1157, %v1166
    %v1178 = vadd.f32 %v1158, %v1170
    %v1179 = vadd.f32 %v1159, %v1174
    %vm1180 = vcmp.ge.f32.partialorder %v1176, 0.0
    %vm1181 = vcmp.ge.f32.partialorder %v1177, 0.0
    %vm1182 = vcmp.ge.f32.partialorder %v1178, 0.0
    %vm1183 = vcmp.ge.f32.partialorder %v1179, 0.0
    %v1184 = vmul.f32 %v1176, 0.2
    %v1185 = vmul.f32 %v1177, 0.2
    %v1186 = vmul.f32 %v1178, 0.2
    %v1187 = vmul.f32 %v1179, 0.2
    %v1188 = vsel %vm1180, %v1176, %v1184
    %v1189 = vsel %vm1181, %v1177, %v1185
    %v1190 = vsel %vm1182, %v1178, %v1186
    %v1191 = vsel %vm1183, %v1179, %v1187
    %v1192 = vmul.f32 %v1188, 1.4142135
    %v1193 = vmul.f32 %v1189, 1.4142135
    %v1194 = vmul.f32 %v1190, 1.4142135
    %v1195 = vmul.f32 %v1191, 1.4142135
    %v1196 = vmul.f32 %v1192, %v815
    %v1197 = vmul.f32 %v1193, %v820
    %v1198 = vmul.f32 %v1194, %v825
    %v1199 = vmul.f32 %v1195, %v830
    %v1201 = vsel %vm917, %v102, 0
    %v1204 = vsel %vm917, %v103, 0
    %v1207 = vsel %vm917, %v104, 0
    %v1210 = vsel %vm917, %v105, 0
    %1212 = vmatprep.subr.mxu0 0.0
    %1213 = vmatpush1.msra.mxu0 %v1196
    %1214 = vmatprep.subr.mxu0 0.0
    %1215 = vmatpush1.msra.mxu0 %v1197
    %1216 = vmatprep.subr.mxu0 0.0
    %1217 = vmatpush1.msra.mxu0 %v1198
    %1218 = vmatprep.subr.mxu0 0.0
    %1219 = vmatpush1.msra.mxu0 %v1199
    %1220 = vmatprep.subr.mxu0 0.0
    %1221 = vmatpush1.msra.mxu0 0.0
    %1222 = vmatprep.subr.mxu0 0.0
    %1223 = vmatpush1.msra.mxu0 0.0
    %1224 = vmatprep.subr.mxu0 0.0
    %1225 = vmatpush1.msra.mxu0 0.0
    %1226 = vmatprep.subr.mxu0 0.0
    %1227 = vmatpush1.msra.mxu0 0.0
    %1228 = vmatprep.subr.mxu0 0.0
    %1229 = vmatpush1.msra.mxu0 0.0
    %1230 = vmatprep.subr.mxu0 0.0
    %1231 = vmatpush1.msra.mxu0 0.0
    %1232 = vmatprep.subr.mxu0 0.0
    %1233 = vmatpush1.msra.mxu0 0.0
    %1234 = vmatprep.subr.mxu0 0.0
    %1235 = vmatpush1.msra.mxu0 0.0
    %1236 = vmatprep.subr.mxu0 0.0
    %1237 = vmatpush1.msra.mxu0 0.0
    %1238 = vmatprep.subr.mxu0 0.0
    %1239 = vmatpush1.msra.mxu0 0.0
    %1240 = vmatprep.subr.mxu0 0.0
    %1241 = vmatpush1.msra.mxu0 0.0
    %1242 = vmatprep.subr.mxu0 0.0
    %1243 = vmatpush1.msra.mxu0 0.0
    %1244 = vmatprep.subr.mxu0 0.0
    %1245 = vmatpush1.msra.mxu0 0.0
    %1246 = vmatprep.subr.mxu0 0.0
    %1247 = vmatpush1.msra.mxu0 0.0
    %1248 = vmatprep.subr.mxu0 0.0
    %1249 = vmatpush1.msra.mxu0 0.0
    %1250 = vmatprep.subr.mxu0 0.0
    %1251 = vmatpush1.msra.mxu0 0.0
    %1252 = vmatprep.subr.mxu0 0.0
    %1253 = vmatpush1.msra.mxu0 0.0
    %1254 = vmatprep.subr.mxu0 0.0
    %1255 = vmatpush1.msra.mxu0 0.0
    %1256 = vmatprep.subr.mxu0 0.0
    %1257 = vmatpush1.msra.mxu0 0.0
    %1258 = vmatprep.subr.mxu0 0.0
    %1259 = vmatpush1.msra.mxu0 0.0
    %1260 = vmatprep.subr.mxu0 0.0
    %1261 = vmatpush1.msra.mxu0 0.0
    %1262 = vmatprep.subr.mxu0 0.0
    %1263 = vmatpush1.msra.mxu0 0.0
    %1264 = vmatprep.subr.mxu0 0.0
    %1265 = vmatpush1.msra.mxu0 0.0
    %1266 = vmatprep.subr.mxu0 0.0
    %1267 = vmatpush1.msra.mxu0 0.0
    %1268 = vmatprep.subr.mxu0 0.0
    %1269 = vmatpush1.msra.mxu0 0.0
    %1270 = vmatprep.subr.mxu0 0.0
    %1271 = vmatpush1.msra.mxu0 0.0
    %1272 = vmatprep.subr.mxu0 0.0
    %1273 = vmatpush1.msra.mxu0 0.0
    %1274 = vmatprep.subr.mxu0 0.0
    %1275 = vmatpush1.msra.mxu0 0.0
    %1276 = vmatprep.mubr.f32.mxu0 0.0
    %1277 = vmatmul.mubr.f32.gmra.mrb[0].mxu0 %v1201
    %v1278 = vpop.f32.mrb[0].mxu0
    %v1279 = vadd.f32 0.0, %v1278
    %v1280 = vpop.f32.mrb[0].mxu0
    %1281 = vmatprep.mubr.f32.mxu0 0.0
    %1282 = vmatmul.mubr.f32.gmra.mrb[0].mxu0 %v1204
    %v1283 = vpop.f32.mrb[0].mxu0
    %v1284 = vadd.f32 0.0, %v1283
    %v1285 = vpop.f32.mrb[0].mxu0
    %1286 = vmatprep.mubr.f32.mxu0 0.0
    %1287 = vmatmul.mubr.f32.gmra.mrb[0].mxu0 %v1207
    %v1288 = vpop.f32.mrb[0].mxu0
    %v1289 = vadd.f32 0.0, %v1288
    %v1290 = vpop.f32.mrb[0].mxu0
    %1291 = vmatprep.mubr.f32.mxu0 0.0
    %1292 = vmatmul.mubr.f32.gmra.mrb[0].mxu0 %v1210
    %v1293 = vpop.f32.mrb[0].mxu0
    %v1294 = vadd.f32 0.0, %v1293
    %v1295 = vpop.f32.mrb[0].mxu0
    %1296 = vdwg.mxu0
    %v1297 = vmul.f32 %v1279, %v895
    %v1298 = vmul.f32 %v1284, %v900
    %v1299 = vmul.f32 %v1289, %v905
    %v1300 = vmul.f32 %v1294, %v910
    %1301 = vset.pattern.permute.xlu0 2
    %1302 = vperm.xlu0 %1301, %v58
    %v1303 = vpop.permute.xlu0 %1302
    %1305 = vset.pattern.permute.xlu0 2
    %1306 = vperm.xlu0 %1305, %v59
    %v1307 = vpop.permute.xlu0 %1306
    %1309 = vset.pattern.permute.xlu0 2
    %1310 = vperm.xlu0 %1309, %v60
    %v1311 = vpop.permute.xlu0 %1310
    %1313 = vset.pattern.permute.xlu0 2
    %1314 = vperm.xlu0 %1313, %v61
    %v1315 = vpop.permute.xlu0 %1314
    %v1317 = vadd.f32 %v1297, %v1303
    %v1318 = vadd.f32 %v1298, %v1307
    %v1319 = vadd.f32 %v1299, %v1311
    %v1320 = vadd.f32 %v1300, %v1315
    %vm1321 = vcmp.ge.f32.partialorder %v1317, 0.0
    %vm1322 = vcmp.ge.f32.partialorder %v1318, 0.0
    %vm1323 = vcmp.ge.f32.partialorder %v1319, 0.0
    %vm1324 = vcmp.ge.f32.partialorder %v1320, 0.0
    %v1325 = vmul.f32 %v1317, 0.2
    %v1326 = vmul.f32 %v1318, 0.2
    %v1327 = vmul.f32 %v1319, 0.2
    %v1328 = vmul.f32 %v1320, 0.2
    %v1329 = vsel %vm1321, %v1317, %v1325
    %v1330 = vsel %vm1322, %v1318, %v1326
    %v1331 = vsel %vm1323, %v1319, %v1327
    %v1332 = vsel %vm1324, %v1320, %v1328
    %v1333 = vmul.f32 %v1329, 1.4142135
    %v1334 = vmul.f32 %v1330, 1.4142135
    %v1335 = vmul.f32 %v1331, 1.4142135
    %v1336 = vmul.f32 %v1332, 1.4142135
    %v1337 = vmul.f32 %v1333, %v835
    %v1338 = vmul.f32 %v1334, %v840
    %v1339 = vmul.f32 %v1335, %v845
    %v1340 = vmul.f32 %v1336, %v850
    %1341 = vset.pattern.permute.xlu0 2
    %1342 = vperm.xlu0 %1341, %v62
    %v1343 = vpop.permute.xlu0 %1342
    %v1346 = vsel %vm917, %v106, 0
    %1348 = vmatprep.subr.mxu0 0.0
    %1349 = vmatpush1.msra.mxu0 %v1337
    %1350 = vmatprep.subr.mxu0 0.0
    %1351 = vmatpush1.msra.mxu0 %v1338
    %1352 = vmatprep.subr.mxu0 0.0
    %1353 = vmatpush1.msra.mxu0 %v1339
    %1354 = vmatprep.subr.mxu0 0.0
    %1355 = vmatpush1.msra.mxu0 %v1340
    %1356 = vmatprep.subr.mxu0 0.0
    %1357 = vmatpush1.msra.mxu0 0.0
    %1358 = vmatprep.subr.mxu0 0.0
    %1359 = vmatpush1.msra.mxu0 0.0
    %1360 = vmatprep.subr.mxu0 0.0
    %1361 = vmatpush1.msra.mxu0 0.0
    %1362 = vmatprep.subr.mxu0 0.0
    %1363 = vmatpush1.msra.mxu0 0.0
    %1364 = vmatprep.subr.mxu0 0.0
    %1365 = vmatpush1.msra.mxu0 0.0
    %1366 = vmatprep.subr.mxu0 0.0
    %1367 = vmatpush1.msra.mxu0 0.0
    %1368 = vmatprep.subr.mxu0 0.0
    %1369 = vmatpush1.msra.mxu0 0.0
    %1370 = vmatprep.subr.mxu0 0.0
    %1371 = vmatpush1.msra.mxu0 0.0
    %1372 = vmatprep.subr.mxu0 0.0
    %1373 = vmatpush1.msra.mxu0 0.0
    %1374 = vmatprep.subr.mxu0 0.0
    %1375 = vmatpush1.msra.mxu0 0.0
    %1376 = vmatprep.subr.mxu0 0.0
    %1377 = vmatpush1.msra.mxu0 0.0
    %1378 = vmatprep.subr.mxu0 0.0
    %1379 = vmatpush1.msra.mxu0 0.0
    %1380 = vmatprep.subr.mxu0 0.0
    %1381 = vmatpush1.msra.mxu0 0.0
    %1382 = vmatprep.subr.mxu0 0.0
    %1383 = vmatpush1.msra.mxu0 0.0
    %1384 = vmatprep.subr.mxu0 0.0
    %1385 = vmatpush1.msra.mxu0 0.0
    %1386 = vmatprep.subr.mxu0 0.0
    %1387 = vmatpush1.msra.mxu0 0.0
    %1388 = vmatprep.subr.mxu0 0.0
    %1389 = vmatpush1.msra.mxu0 0.0
    %1390 = vmatprep.subr.mxu0 0.0
    %1391 = vmatpush1.msra.mxu0 0.0
    %1392 = vmatprep.subr.mxu0 0.0
    %1393 = vmatpush1.msra.mxu0 0.0
    %1394 = vmatprep.subr.mxu0 0.0
    %1395 = vmatpush1.msra.mxu0 0.0
    %1396 = vmatprep.subr.mxu0 0.0
    %1397 = vmatpush1.msra.mxu0 0.0
    %1398 = vmatprep.subr.mxu0 0.0
    %1399 = vmatpush1.msra.mxu0 0.0
    %1400 = vmatprep.subr.mxu0 0.0
    %1401 = vmatpush1.msra.mxu0 0.0
    %1402 = vmatprep.subr.mxu0 0.0
    %1403 = vmatpush1.msra.mxu0 0.0
    %1404 = vmatprep.subr.mxu0 0.0
    %1405 = vmatpush1.msra.mxu0 0.0
    %1406 = vmatprep.subr.mxu0 0.0
    %1407 = vmatpush1.msra.mxu0 0.0
    %1408 = vmatprep.subr.mxu0 0.0
    %1409 = vmatpush1.msra.mxu0 0.0
    %1410 = vmatprep.subr.mxu0 0.0
    %1411 = vmatpush1.msra.mxu0 0.0
    %1412 = vmatprep.mubr.f32.mxu0 0.0
    %1413 = vmatmul.mubr.f32.gmra.mrb[0].mxu0 %v1346
    %v1414 = vpop.f32.mrb[0].mxu0
    %v1415 = vadd.f32 %v1343, %v1414
    %v1416 = vpop.f32.mrb[0].mxu0
    %1417 = vdwg.mxu0
    %v1418 = vmul.f32 %v1415, 127.5
    %v1419 = vadd.f32 %v1418, 128.0
    %v1420 = vmax.f32 %v1419, 0.0
    %v1421 = vmin.f32 %v1420, 255.0
    %v1422 = vld [vmem:[#allocation5] sm:$0xff]
    %v1423 = vld [vmem:[#allocation5 + $0x8] sm:$0xff]
    %v1424 = vld [vmem:[#allocation5 + $0x10] sm:$0xff]
    %v1425 = vld [vmem:[#allocation5 + $0x18] sm:$0xff]
    %v1426 = vld [vmem:[#allocation5 + $0x20] sm:$0xff]
    %v1427 = vld [vmem:[#allocation5 + $0x28] sm:$0xff]
    %v1428 = vld [vmem:[#allocation5 + $0x30] sm:$0xff]
    %v1429 = vld [vmem:[#allocation5 + $0x38] sm:$0xff]
    %v1430 = vld [vmem:[#allocation5 + $0x40] sm:$0xff]
    %v1431 = vld [vmem:[#allocation5 + $0x48] sm:$0xff]
    %v1432 = vld [vmem:[#allocation5 + $0x50] sm:$0xff]
    %v1433 = vld [vmem:[#allocation5 + $0x58] sm:$0xff]
    %v1434 = vld [vmem:[#allocation5 + $0x60] sm:$0xff]
    %v1435 = vld [vmem:[#allocation5 + $0x68] sm:$0xff]
    %v1436 = vld [vmem:[#allocation5 + $0x70] sm:$0xff]
    %v1437 = vld [vmem:[#allocation5 + $0x78] sm:$0xff]
    %v1438 = vld [vmem:[#allocation5 + $0x80] sm:$0xff]
    %v1439 = vld [vmem:[#allocation5 + $0x88] sm:$0xff]
    %v1440 = vld [vmem:[#allocation5 + $0x90] sm:$0xff]
    %v1441 = vld [vmem:[#allocation5 + $0x98] sm:$0xff]
    %v1442 = vld [vmem:[#allocation5 + $0xa0] sm:$0xff]
    %v1443 = vld [vmem:[#allocation5 + $0xa8] sm:$0xff]
    %v1444 = vld [vmem:[#allocation5 + $0xb0] sm:$0xff]
    %v1445 = vld [vmem:[#allocation5 + $0xb8] sm:$0xff]
    %v1446 = vld [vmem:[#allocation5 + $0xc0] sm:$0xff]
    %v1447 = vld [vmem:[#allocation5 + $0xc8] sm:$0xff]
    %v1448 = vld [vmem:[#allocation5 + $0xd0] sm:$0xff]
    %v1449 = vld [vmem:[#allocation5 + $0xd8] sm:$0xff]
    %v1450 = vld [vmem:[#allocation5 + $0xe0] sm:$0xff]
    %v1451 = vld [vmem:[#allocation5 + $0xe8] sm:$0xff]
    %v1452 = vld [vmem:[#allocation5 + $0xf0] sm:$0xff]
    %v1453 = vld [vmem:[#allocation5 + $0xf8] sm:$0xff]
    %v1454 = vld [vmem:[#allocation5 + $0x100] sm:$0xff]
    %v1455 = vld [vmem:[#allocation5 + $0x108] sm:$0xff]
    %v1456 = vld [vmem:[#allocation5 + $0x110] sm:$0xff]
    %v1457 = vld [vmem:[#allocation5 + $0x118] sm:$0xff]
    %v1458 = vld [vmem:[#allocation5 + $0x120] sm:$0xff]
    %v1459 = vld [vmem:[#allocation5 + $0x128] sm:$0xff]
    %v1460 = vld [vmem:[#allocation5 + $0x130] sm:$0xff]
    %v1461 = vld [vmem:[#allocation5 + $0x138] sm:$0xff]
    %v1462 = vld [vmem:[#allocation5 + $0x140] sm:$0xff]
    %v1463 = vld [vmem:[#allocation5 + $0x148] sm:$0xff]
    %v1464 = vld [vmem:[#allocation5 + $0x150] sm:$0xff]
    %v1465 = vld [vmem:[#allocation5 + $0x158] sm:$0xff]
    %v1466 = vld [vmem:[#allocation5 + $0x160] sm:$0xff]
    %v1467 = vld [vmem:[#allocation5 + $0x168] sm:$0xff]
    %v1468 = vld [vmem:[#allocation5 + $0x170] sm:$0xff]
    %v1469 = vld [vmem:[#allocation5 + $0x178] sm:$0xff]
    %v1470 = vld [vmem:[#allocation5 + $0x180] sm:$0xff]
    %v1471 = vld [vmem:[#allocation5 + $0x188] sm:$0xff]
    %v1472 = vld [vmem:[#allocation5 + $0x190] sm:$0xff]
    %v1473 = vld [vmem:[#allocation5 + $0x198] sm:$0xff]
    %v1474 = vld [vmem:[#allocation5 + $0x1a0] sm:$0xff]
    %v1475 = vld [vmem:[#allocation5 + $0x1a8] sm:$0xff]
    %v1476 = vld [vmem:[#allocation5 + $0x1b0] sm:$0xff]
    %v1477 = vld [vmem:[#allocation5 + $0x1b8] sm:$0xff]
    %v1478 = vld [vmem:[#allocation5 + $0x1c0] sm:$0xff]
    %v1479 = vld [vmem:[#allocation5 + $0x1c8] sm:$0xff]
    %v1480 = vld [vmem:[#allocation5 + $0x1d0] sm:$0xff]
    %v1481 = vld [vmem:[#allocation5 + $0x1d8] sm:$0xff]
    %v1482 = vld [vmem:[#allocation5 + $0x1e0] sm:$0xff]
    %v1483 = vld [vmem:[#allocation5 + $0x1e8] sm:$0xff]
    %v1484 = vld [vmem:[#allocation5 + $0x1f0] sm:$0xff]
    %v1485 = vld [vmem:[#allocation5 + $0x1f8] sm:$0xff]
    %1486 = vmatprep.subr.mxu0 %v1423
    %1487 = vmatpush1.msra.mxu0 %v1422
    %1488 = vmatprep.subr.mxu0 %v1427
    %1489 = vmatpush1.msra.mxu0 %v1426
    %1490 = vmatprep.subr.mxu0 %v1431
    %1491 = vmatpush1.msra.mxu0 %v1430
    %1492 = vmatprep.subr.mxu0 %v1435
    %1493 = vmatpush1.msra.mxu0 %v1434
    %1494 = vmatprep.subr.mxu0 %v1439
    %1495 = vmatpush1.msra.mxu0 %v1438
    %1496 = vmatprep.subr.mxu0 %v1443
    %1497 = vmatpush1.msra.mxu0 %v1442
    %1498 = vmatprep.subr.mxu0 %v1447
    %1499 = vmatpush1.msra.mxu0 %v1446
    %1500 = vmatprep.subr.mxu0 %v1451
    %1501 = vmatpush1.msra.mxu0 %v1450
    %1502 = vmatprep.subr.mxu0 %v1455
    %1503 = vmatpush1.msra.mxu0 %v1454
    %1504 = vmatprep.subr.mxu0 %v1459
    %1505 = vmatpush1.msra.mxu0 %v1458
    %1506 = vmatprep.subr.mxu0 %v1463
    %1507 = vmatpush1.msra.mxu0 %v1462
    %1508 = vmatprep.subr.mxu0 %v1467
    %1509 = vmatpush1.msra.mxu0 %v1466
    %1510 = vmatprep.subr.mxu0 %v1471
    %1511 = vmatpush1.msra.mxu0 %v1470
    %1512 = vmatprep.subr.mxu0 %v1475
    %1513 = vmatpush1.msra.mxu0 %v1474
    %1514 = vmatprep.subr.mxu0 %v1479
    %1515 = vmatpush1.msra.mxu0 %v1478
    %1516 = vmatprep.subr.mxu0 %v1483
    %1517 = vmatpush1.msra.mxu0 %v1482
    %1518 = vmatprep.subr.mxu0 0.0
    %1519 = vmatpush1.msra.mxu0 0.0
    %1520 = vmatprep.subr.mxu0 0.0
    %1521 = vmatpush1.msra.mxu0 0.0
    %1522 = vmatprep.subr.mxu0 0.0
    %1523 = vmatpush1.msra.mxu0 0.0
    %1524 = vmatprep.subr.mxu0 0.0
    %1525 = vmatpush1.msra.mxu0 0.0
    %1526 = vmatprep.subr.mxu0 0.0
    %1527 = vmatpush1.msra.mxu0 0.0
    %1528 = vmatprep.subr.mxu0 0.0
    %1529 = vmatpush1.msra.mxu0 0.0
    %1530 = vmatprep.subr.mxu0 0.0
    %1531 = vmatpush1.msra.mxu0 0.0
    %1532 = vmatprep.subr.mxu0 0.0
    %1533 = vmatpush1.msra.mxu0 0.0
    %1534 = vmatprep.subr.mxu0 0.0
    %1535 = vmatpush1.msra.mxu0 0.0
    %1536 = vmatprep.subr.mxu0 0.0
    %1537 = vmatpush1.msra.mxu0 0.0
    %1538 = vmatprep.subr.mxu0 0.0
    %1539 = vmatpush1.msra.mxu0 0.0
    %1540 = vmatprep.subr.mxu0 0.0
    %1541 = vmatpush1.msra.mxu0 0.0
    %1542 = vmatprep.subr.mxu0 0.0
    %1543 = vmatpush1.msra.mxu0 0.0
    %1544 = vmatprep.subr.mxu0 0.0
    %1545 = vmatpush1.msra.mxu0 0.0
    %1546 = vmatprep.subr.mxu0 0.0
    %1547 = vmatpush1.msra.mxu0 0.0
    %1548 = vmatprep.subr.mxu0 0.0
    %1549 = vmatpush1.msra.mxu0 0.0
    %1550 = vmatprep.mubr.f32.mxu0 0.0
    %1551 = vmatmul.mubr.f32.gmra.mrb[0].mxu0 %v1421
    %v1552 = vpop.f32.mrb[0].mxu0
    %v1553 = vadd.f32 0.0, %v1552
    %v1554 = vpop.f32.mrb[0].mxu0
    %v1555 = vadd.f32 0.0, %v1554
    %1556 = vdwg.mxu0
    %1557 = vmatprep.subr.mxu0 %v1425
    %1558 = vmatpush1.msra.mxu0 %v1424
    %1559 = vmatprep.subr.mxu0 %v1429
    %1560 = vmatpush1.msra.mxu0 %v1428
    %1561 = vmatprep.subr.mxu0 %v1433
    %1562 = vmatpush1.msra.mxu0 %v1432
    %1563 = vmatprep.subr.mxu0 %v1437
    %1564 = vmatpush1.msra.mxu0 %v1436
    %1565 = vmatprep.subr.mxu0 %v1441
    %1566 = vmatpush1.msra.mxu0 %v1440
    %1567 = vmatprep.subr.mxu0 %v1445
    %1568 = vmatpush1.msra.mxu0 %v1444
    %1569 = vmatprep.subr.mxu0 %v1449
    %1570 = vmatpush1.msra.mxu0 %v1448
    %1571 = vmatprep.subr.mxu0 %v1453
    %1572 = vmatpush1.msra.mxu0 %v1452
    %1573 = vmatprep.subr.mxu0 %v1457
    %1574 = vmatpush1.msra.mxu0 %v1456
    %1575 = vmatprep.subr.mxu0 %v1461
    %1576 = vmatpush1.msra.mxu0 %v1460
    %1577 = vmatprep.subr.mxu0 %v1465
    %1578 = vmatpush1.msra.mxu0 %v1464
    %1579 = vmatprep.subr.mxu0 %v1469
    %1580 = vmatpush1.msra.mxu0 %v1468
    %1581 = vmatprep.subr.mxu0 %v1473
    %1582 = vmatpush1.msra.mxu0 %v1472
    %1583 = vmatprep.subr.mxu0 %v1477
    %1584 = vmatpush1.msra.mxu0 %v1476
    %1585 = vmatprep.subr.mxu0 %v1481
    %1586 = vmatpush1.msra.mxu0 %v1480
    %1587 = vmatprep.subr.mxu0 %v1485
    %1588 = vmatpush1.msra.mxu0 %v1484
    %1589 = vmatprep.subr.mxu0 0.0
    %1590 = vmatpush1.msra.mxu0 0.0
    %1591 = vmatprep.subr.mxu0 0.0
    %1592 = vmatpush1.msra.mxu0 0.0
    %1593 = vmatprep.subr.mxu0 0.0
    %1594 = vmatpush1.msra.mxu0 0.0
    %1595 = vmatprep.subr.mxu0 0.0
    %1596 = vmatpush1.msra.mxu0 0.0
    %1597 = vmatprep.subr.mxu0 0.0
    %1598 = vmatpush1.msra.mxu0 0.0
    %1599 = vmatprep.subr.mxu0 0.0
    %1600 = vmatpush1.msra.mxu0 0.0
    %1601 = vmatprep.subr.mxu0 0.0
    %1602 = vmatpush1.msra.mxu0 0.0
    %1603 = vmatprep.subr.mxu0 0.0
    %1604 = vmatpush1.msra.mxu0 0.0
    %1605 = vmatprep.subr.mxu0 0.0
    %1606 = vmatpush1.msra.mxu0 0.0
    %1607 = vmatprep.subr.mxu0 0.0
    %1608 = vmatpush1.msra.mxu0 0.0
    %1609 = vmatprep.subr.mxu0 0.0
    %1610 = vmatpush1.msra.mxu0 0.0
    %1611 = vmatprep.subr.mxu0 0.0
    %1612 = vmatpush1.msra.mxu0 0.0
    %1613 = vmatprep.subr.mxu0 0.0
    %1614 = vmatpush1.msra.mxu0 0.0
    %1615 = vmatprep.subr.mxu0 0.0
    %1616 = vmatpush1.msra.mxu0 0.0
    %1617 = vmatprep.subr.mxu0 0.0
    %1618 = vmatpush1.msra.mxu0 0.0
    %1619 = vmatprep.subr.mxu0 0.0
    %1620 = vmatpush1.msra.mxu0 0.0
    %1621 = vmatprep.mubr.f32.mxu0 0.0
    %1622 = vmatmul.mubr.f32.gmra.mrb[0].mxu0 %v1421
    %v1623 = vpop.f32.mrb[0].mxu0
    %v1624 = vadd.f32 0.0, %v1623
    %v1625 = vpop.f32.mrb[0].mxu0
    %v1626 = vadd.f32 0.0, %v1625
    %1627 = vdwg.mxu0
    %v1632 = vcombine.low %v1553, %v1555
    %v1633 = vcombine.low %v1624, %v1626
    %1636 = vst [vmem:[%s5] sm:$0x77] %v1632
    %1637 = vst [vmem:[%s5 + $0x8] sm:$0x77] %v1633
    // Predicated region
    $region30: #{generate_images.1} parent=1 // pred_check
      _
    $region31: #{generate_images.1} parent=1 // pred_check_branch
      %1639 = sbr.rel (0) target = $region33
    $region32: #{generate_images.1} parent=1 // pred_region
      _
    $region33: #{generate_images.1} parent=1 // pred_fallthru
      _
    // Predicated region
    $region34: #{generate_images.1} parent=1 // pred_check
      _
    $region35: #{generate_images.1} parent=1 // pred_check_branch
      %1641 = sbr.rel (0) target = $region37
    $region36: #{generate_images.1} parent=1 // pred_region
      _
    $region37: #{generate_images.1} parent=1 // pred_fallthru
      _
    %1642 = vsyncpa [#allocation4], 1
    %1643 = vsyncpa [#allocation6], 1

</llo_original>
